<compile_context>
chip_gen: v6e
topology: v6e:2x2x1
jax: 0.10.0
libtpu: 0.0.40
codegen_flags: <defaults>
</compile_context>

<pallas_src>
import functools

import numpy as np
import jax
import jax.numpy as jnp
from jax import lax
from jax.experimental import pallas as pl
from jax.experimental.pallas import tpu as pltpu


def _round_up(x, m):
    return ((x + m - 1) // m) * m


def _conv_block_kernel(masks_ref, x_ref, w1_ref, b1_ref, w2_ref, b2_ref,
                       ada_ref, o_ref, col_ref, *,
                       H, W, Cin, Cout, Cin_pad, Cout_pad):
    HW = H * W
    inv_hw = 1.0 / HW
    inv_hw1 = 1.0 / (HW - 1)

    def shifted(img, dy, dx):
        # t[:, h*W + w] = img[:, (h+dy)*W + (w+dx)]  (zero outside the image).
        # A (dy, dx) stencil offset is one circular lane roll of the flattened
        # spatial axis (XLU slot); wrapped positions are exactly the
        # out-of-image positions and are zeroed by a precomputed edge mask.
        if dy == 0 and dx == 0:
            return img
        shift = (-(dy * W + dx)) % HW
        t = pltpu.roll(img, shift, axis=1)
        tap = (dy + 1) * 3 + (dx + 1)
        return t * masks_ref[tap:tap + 1, :]        # (1, HW) mask broadcast

    def conv3x3(img, w_ref, b_ref, C, Cpad):
        # im2col into the shared bf16 scratch (tap-major, channel stride Cpad,
        # tile-aligned starts), then ONE MXU matmul with K = 9*Cpad
        # (bf16 operands, f32 accumulation).  Pad rows carry only finite
        # values (zero-filled at kernel start) and hit zero weight columns.
        for dy in (-1, 0, 1):
            for dx in (-1, 0, 1):
                tap = (dy + 1) * 3 + (dx + 1)
                col_ref[tap * Cpad:tap * Cpad + C, :] = (
                    shifted(img, dy, dx).astype(jnp.bfloat16))
        out = jnp.dot(w_ref[...], col_ref[0:9 * Cpad, :],
                      preferred_element_type=jnp.float32)
        return out + b_ref[...]                     # bias (zero-init, kept for fidelity)

    def blur(img):
        # separable [1,2,1]/4 x [1,2,1]/4 with zero padding (6 taps, not 9)
        v = 0.5 * img + 0.25 * (shifted(img, -1, 0) + shifted(img, 1, 0))
        return 0.5 * v + 0.25 * (shifted(v, 0, -1) + shifted(v, 0, 1))

    def lrelu(x):
        return jnp.maximum(x, 0.2 * x)

    def adanorm(h, a, b):
        # (h - mean) / std(ddof=1) * a + b, two-pass (centered sum of squares
        # => var >= 0, no cancellation), rsqrt on the EUP.  No epsilon,
        # matching the PyTorch module exactly.
        mean = jnp.sum(h, axis=1, keepdims=True) * inv_hw
        d = h - mean
        var = jnp.sum(d * d, axis=1, keepdims=True) * inv_hw1
        return d * (a * lax.rsqrt(var)) + b

    # Zero the col scratch once per step only when channel padding exists, so
    # the zero-weight pad columns never meet uninitialized (possibly NaN) VMEM.
    if Cin_pad != Cin or Cout_pad != Cout:
        col_ref[...] = jnp.zeros_like(col_ref)

    ada = ada_ref[0]                                   # (Cout, 4): a1,b1,a2,b2
    a1s, a1b = ada[:, 0:1], ada[:, 1:2]
    a2s, a2b = ada[:, 2:3], ada[:, 3:4]

    x = x_ref[0]                                       # (Cin, HW) f32
    h = conv3x3(x, w1_ref, b1_ref, Cin, Cin_pad)       # EqualConv2d #1
    h = lrelu(blur(h))                                 # Blur + LeakyReLU(0.2)
    h = adanorm(h, a1s, a1b)                           # AdaNorm #1
    h = conv3x3(h, w2_ref, b2_ref, Cout, Cout_pad)     # EqualConv2d #2
    h = lrelu(h)                                       # LeakyReLU(0.2)
    o_ref[0] = adanorm(h, a2s, a2b)                    # AdaNorm #2


def conv_block_pallas(x_nchw, params):
    B, Cin, H, W = x_nchw.shape
    Cout = params["w2"].shape[0]
    HW = H * W

    # bf16 sublane tile is 16 rows: pad the per-tap channel stride so each tap
    # write in the im2col scratch starts on a tile boundary.
    BF16_TILE = 16
    Cin_pad = _round_up(Cin, BF16_TILE)
    Cout_pad = _round_up(Cout, BF16_TILE)
    Kpad = max(Cin_pad, Cout_pad)

    # ---- parameter prep (plain JAX glue) ----
    # EqualLR: weight * sqrt(2 / fan_in) * gain(=1)
    w1 = params["w1"] * np.sqrt(2.0 / (Cin * 9))
    w2 = params["w2"] * np.sqrt(2.0 / (Cout * 9))

    def pack_w(w, C, Cpad):
        # (Cout, C, 3, 3) -> (Cout, ky, kx, C) -> zero-pad C -> (Cout, 9*Cpad)
        wt = jnp.transpose(w, (0, 2, 3, 1))
        wt = jnp.pad(wt, ((0, 0), (0, 0), (0, 0), (0, Cpad - C)))
        return wt.reshape(Cout, 9 * Cpad).astype(jnp.bfloat16)

    w1_r = pack_w(w1, Cin, Cin_pad)
    w2_r = pack_w(w2, Cout, Cout_pad)
    b1 = params["b1"].reshape(Cout, 1)
    b2 = params["b2"].reshape(Cout, 1)

    # AdaNorm.update(): A = Linear(latent).  Called OUTSIDE ConvBlock.forward
    # in the original code, so it is computed here in plain JAX and fed in as
    # ONE merged (B, Cout, 4) block: [a1_scale, a1_shift, a2_scale, a2_shift].
    A1 = params["w_latent"] @ params["mod1_w"].T + params["mod1_b"]   # (B, 2*Cout)
    A2 = params["w_latent"] @ params["mod2_w"].T + params["mod2_b"]
    ada = jnp.stack([A1[:, :Cout], A1[:, Cout:],
                     A2[:, :Cout], A2[:, Cout:]], axis=-1)            # (B, Cout, 4)

    # Per-tap edge masks for the 3x3 stencils (1 inside the image, 0 where the
    # circular roll wrapped), precomputed on the host.
    # TODO(synk): if H*W is ever not a multiple of 128, pad the flattened
    # spatial axis to a lane multiple (extend masks with zeros and exclude the
    # pad lanes from the AdaNorm sums/divisor) to keep stores unmasked.
    hh = np.repeat(np.arange(H), W)
    ww = np.tile(np.arange(W), H)
    masks = np.stack([
        ((hh + dy >= 0) & (hh + dy < H) & (ww + dx >= 0) & (ww + dx < W))
        for dy in (-1, 0, 1) for dx in (-1, 0, 1)
    ]).astype(np.float32)                                             # (9, HW)
    masks = jnp.asarray(masks)

    x_flat = x_nchw.reshape(B, Cin, HW)     # NCHW -> (B, C, H*W), free reshape

    # Generation-aware scoped VMEM: ~80% of the chip's per-core capacity
    # (≈51 MiB on 64 MiB v7x parts, ≈102 MiB on 128 MiB v5e/v6e parts).
    try:
        vmem_cap = int(pltpu.get_tpu_info().vmem_capacity_bytes)
    except Exception:
        vmem_cap = 64 * 2 ** 20                      # conservative fallback
    vmem_limit = max(32 * 2 ** 20, min(int(vmem_cap * 0.8), 110 * 2 ** 20))

    # Constant-index operands: single-buffer (no pointless VMEM duplication).
    const_buf = dict(pipeline_mode=pl.Buffered(1))

    kernel = functools.partial(_conv_block_kernel, H=H, W=W, Cin=Cin,
                               Cout=Cout, Cin_pad=Cin_pad, Cout_pad=Cout_pad)
    out = pl.pallas_call(
        kernel,
        out_shape=jax.ShapeDtypeStruct((B, Cout, HW), jnp.float32),
        grid=(B,),
        in_specs=[
            pl.BlockSpec((9, HW), lambda b: (0, 0), **const_buf),          # edge masks
            pl.BlockSpec((1, Cin, HW), lambda b: (b, 0, 0)),               # x
            pl.BlockSpec((Cout, 9 * Cin_pad), lambda b: (0, 0), **const_buf),   # w1
            pl.BlockSpec((Cout, 1), lambda b: (0, 0), **const_buf),        # b1
            pl.BlockSpec((Cout, 9 * Cout_pad), lambda b: (0, 0), **const_buf),  # w2
            pl.BlockSpec((Cout, 1), lambda b: (0, 0), **const_buf),        # b2
            pl.BlockSpec((1, Cout, 4), lambda b: (b, 0, 0)),               # AdaNorm A's
        ],
        out_specs=pl.BlockSpec((1, Cout, HW), lambda b: (b, 0, 0)),
        scratch_shapes=[pltpu.VMEM((9 * Kpad, HW), jnp.bfloat16)],  # shared im2col
        compiler_params=pltpu.CompilerParams(
            dimension_semantics=("parallel",),
            vmem_limit_bytes=vmem_limit),
        # TODO(synk): for production shapes (large H*W*C) or B==1 on v7x, add a
        # spatial row-band grid axis (grid=(B, n_bands)) with +-1-row halos and
        # carry per-channel sum/sumsq across an 'arbitrary' band axis
        # (finalize AdaNorm with pl.when on the last band), and/or block
        # several images per grid step to amortize per-step overhead.
    )(masks, x_flat, w1_r, b1, w2_r, b2, ada)

    return out.reshape(B, Cout, H, W)       # (B, C, H*W) -> NCHW, free reshape


# ---------------- pure-JAX reference (mirrors the PyTorch forward) ----------------
def conv_block_ref(x, params):
    B, Cin, H, W = x.shape
    Cout = params["w2"].shape[0]
    w1 = params["w1"] * np.sqrt(2.0 / (Cin * 9))
    w2 = params["w2"] * np.sqrt(2.0 / (Cout * 9))
    A1 = params["w_latent"] @ params["mod1_w"].T + params["mod1_b"]
    A2 = params["w_latent"] @ params["mod2_w"].T + params["mod2_b"]

    def conv(x, w, b):
        y = lax.conv_general_dilated(x, w, (1, 1), ((1, 1), (1, 1)),
                                     dimension_numbers=("NCHW", "OIHW", "NCHW"),
                                     precision=jax.lax.Precision.HIGHEST)
        return y + b[None, :, None, None]

    def blur(x):
        C = x.shape[1]
        f1 = jnp.array([1.0, 2.0, 1.0], jnp.float32)
        f = jnp.outer(f1, f1)
        f = f / jnp.sum(f)
        f = jnp.tile(f[None, None], (C, 1, 1, 1))
        return lax.conv_general_dilated(x, f, (1, 1), ((1, 1), (1, 1)),
                                        dimension_numbers=("NCHW", "OIHW", "NCHW"),
                                        feature_group_count=C,
                                        precision=jax.lax.Precision.HIGHEST)

    def lrelu(x):
        return jnp.where(x > 0, x, 0.2 * x)

    def adanorm(x, A):
        flat = x.reshape(x.shape[0], x.shape[1], -1)
        m = flat.mean(axis=2)[:, :, None, None]
        s = jnp.std(flat, axis=2, ddof=1)[:, :, None, None]
        o2 = (x - m) / s
        return A[:, :Cout, None, None] * o2 + A[:, Cout:, None, None]

    h = conv(x, w1, params["b1"]); h = blur(h); h = lrelu(h); h = adanorm(h, A1)
    h = conv(h, w2, params["b2"]); h = lrelu(h); h = adanorm(h, A2)
    return h


def init_params(key, Cin, Cout, nz, B):
    ks = jax.random.split(key, 5)
    # EqualConv2d: conv.weight.data.normal_(); conv.bias.data.zero_()
    w1 = jax.random.normal(ks[0], (Cout, Cin, 3, 3), jnp.float32)
    b1 = jnp.zeros((Cout,), jnp.float32)
    w2 = jax.random.normal(ks[1], (Cout, Cout, 3, 3), jnp.float32)
    b2 = jnp.zeros((Cout,), jnp.float32)
    # AdaNorm.mod = nn.Linear(nz, 2*Cout), xavier_normal (gain=1), bias = 1
    xav = np.sqrt(2.0 / (nz + 2 * Cout))
    mod1_w = jax.random.normal(ks[2], (2 * Cout, nz), jnp.float32) * xav
    mod1_b = jnp.ones((2 * Cout,), jnp.float32)
    mod2_w = jax.random.normal(ks[3], (2 * Cout, nz), jnp.float32) * xav
    mod2_b = jnp.ones((2 * Cout,), jnp.float32)
    # latent fed to AdaNorm.update (args.nz + args.n_label wide)
    w_latent = jax.random.normal(ks[4], (B, nz), jnp.float32)
    return dict(w1=w1, b1=b1, w2=w2, b2=b2,
                mod1_w=mod1_w, mod1_b=mod1_b, mod2_w=mod2_w, mod2_b=mod2_b,
                w_latent=w_latent)


if __name__ == "__main__":
    B, Cin, Cout, H, W, nz = 2, 4, 8, 16, 16, 32
    key = jax.random.PRNGKey(0)
    kx, kp = jax.random.split(key)
    x = jax.random.normal(kx, (B, Cin, H, W), jnp.float32)
    params = init_params(kp, Cin, Cout, nz, B)

    out = conv_block_pallas(x, params)
    out = jax.block_until_ready(out)

    ref = conv_block_ref(x, params)
    assert out.shape == (B, Cout, H, W)
    # bf16 MXU operands (f32 accumulation) shift numerics slightly vs the
    # f32 HIGHEST reference; check the normwise relative error (typ. < 1%).
    rel = float(jnp.linalg.norm(out - ref) / jnp.linalg.norm(ref))
    assert rel < 3e-2, f"normwise rel err {rel}"
    print("KERNEL_OK")
</pallas_src>

<mosaic_0001>
module attributes {stable_mosaic.version = 11 : i64} {
  func.func @_conv_block_kernel(%arg0: i32, %arg1: memref<9x256xf32, #tpu.memory_space<vmem>>, %arg2: memref<1x4x256xf32, #tpu.memory_space<vmem>>, %arg3: memref<8x144xbf16, #tpu.memory_space<vmem>>, %arg4: memref<8x1xf32, #tpu.memory_space<vmem>>, %arg5: memref<8x144xbf16, #tpu.memory_space<vmem>>, %arg6: memref<8x1xf32, #tpu.memory_space<vmem>>, %arg7: memref<1x8x4xf32, #tpu.memory_space<vmem>>, %arg8: memref<1x8x256xf32, #tpu.memory_space<vmem>>, %arg9: memref<144x256xbf16, #tpu.memory_space<vmem>>) attributes {dimension_semantics = [#tpu.dimension_semantics<parallel>], iteration_bounds = array<i64: 2>, scalar_prefetch = 0 : i64, scratch_operands = 1 : i64, tpu.core_type = #tpu.core_type<tc>, window_params = [{pipeline_mode = #tpu.pipeline_mode<synchronous>, transform_indices = @transform_0, window_bounds = array<i64: 9, 256>}, {transform_indices = @transform_1, window_bounds = array<i64: 1, 4, 256>}, {pipeline_mode = #tpu.pipeline_mode<synchronous>, transform_indices = @transform_2, window_bounds = array<i64: 8, 144>}, {pipeline_mode = #tpu.pipeline_mode<synchronous>, transform_indices = @transform_3, window_bounds = array<i64: 8, 1>}, {pipeline_mode = #tpu.pipeline_mode<synchronous>, transform_indices = @transform_4, window_bounds = array<i64: 8, 144>}, {pipeline_mode = #tpu.pipeline_mode<synchronous>, transform_indices = @transform_5, window_bounds = array<i64: 8, 1>}, {transform_indices = @transform_6, window_bounds = array<i64: 1, 8, 4>}, {transform_indices = @transform_7, window_bounds = array<i64: 1, 8, 256>}]} {
    %cst = arith.constant 0.000000e+00 : bf16
    %0 = vector.broadcast %cst : bf16 to vector<144x256xbf16>
    %c0 = arith.constant 0 : index
    %c0_0 = arith.constant 0 : index
    %1 = vector.load %arg9[%c0, %c0_0] : memref<144x256xbf16, #tpu.memory_space<vmem>>, vector<144x256xbf16>
    tpu.vector_store %arg9[%c0, %c0_0], %0 {strides = array<i32>} : memref<144x256xbf16, #tpu.memory_space<vmem>>, vector<144x256xbf16>,
    %c0_1 = arith.constant 0 : index
    %c0_2 = arith.constant 0 : index
    %c0_3 = arith.constant 0 : index
    %2 = vector.load %arg7[%c0_1, %c0_2, %c0_3] : memref<1x8x4xf32, #tpu.memory_space<vmem>>, vector<1x8x4xf32>
    %3 = vector.shape_cast %2 : vector<1x8x4xf32> to vector<8x4xf32>
    %4 = vector.extract_strided_slice %3 {offsets = [0, 0], sizes = [8, 1], strides = [1, 1]} : vector<8x4xf32> to vector<8x1xf32>
    %5 = vector.extract_strided_slice %3 {offsets = [0, 1], sizes = [8, 1], strides = [1, 1]} : vector<8x4xf32> to vector<8x1xf32>
    %6 = vector.extract_strided_slice %3 {offsets = [0, 2], sizes = [8, 1], strides = [1, 1]} : vector<8x4xf32> to vector<8x1xf32>
    %7 = vector.extract_strided_slice %3 {offsets = [0, 3], sizes = [8, 1], strides = [1, 1]} : vector<8x4xf32> to vector<8x1xf32>
    %c0_4 = arith.constant 0 : index
    %c0_5 = arith.constant 0 : index
    %c0_6 = arith.constant 0 : index
    %8 = vector.load %arg2[%c0_4, %c0_5, %c0_6] : memref<1x4x256xf32, #tpu.memory_space<vmem>>, vector<1x4x256xf32>
    %9 = vector.shape_cast %8 : vector<1x4x256xf32> to vector<4x256xf32>
    %c17_i32 = arith.constant 17 : i32
    %10 = tpu.dynamic_rotate %9 by %c17_i32 dim 1 : vector<4x256xf32>, i32 -> vector<4x256xf32>
    %c0_7 = arith.constant 0 : index
    %c0_8 = arith.constant 0 : index
    %11 = vector.load %arg1[%c0_7, %c0_8] : memref<9x256xf32, #tpu.memory_space<vmem>>, vector<1x256xf32>
    %12 = vector.broadcast %11 : vector<1x256xf32> to vector<4x256xf32>
    %13 = arith.mulf %10, %12 : vector<4x256xf32>
    %14 = arith.truncf %13 : vector<4x256xf32> to vector<4x256xbf16>
    %c0_9 = arith.constant 0 : index
    %c0_10 = arith.constant 0 : index
    %15 = vector.load %arg9[%c0_9, %c0_10] : memref<144x256xbf16, #tpu.memory_space<vmem>>, vector<4x256xbf16>
    tpu.vector_store %arg9[%c0_9, %c0_10], %14 {strides = array<i32>} : memref<144x256xbf16, #tpu.memory_space<vmem>>, vector<4x256xbf16>,
    %c16_i32 = arith.constant 16 : i32
    %16 = tpu.dynamic_rotate %9 by %c16_i32 dim 1 : vector<4x256xf32>, i32 -> vector<4x256xf32>
    %c1 = arith.constant 1 : index
    %c0_11 = arith.constant 0 : index
    %17 = vector.load %arg1[%c1, %c0_11] : memref<9x256xf32, #tpu.memory_space<vmem>>, vector<1x256xf32>
    %18 = vector.broadcast %17 : vector<1x256xf32> to vector<4x256xf32>
    %19 = arith.mulf %16, %18 : vector<4x256xf32>
    %20 = arith.truncf %19 : vector<4x256xf32> to vector<4x256xbf16>
    %c16 = arith.constant 16 : index
    %c0_12 = arith.constant 0 : index
    %21 = vector.load %arg9[%c16, %c0_12] : memref<144x256xbf16, #tpu.memory_space<vmem>>, vector<4x256xbf16>
    tpu.vector_store %arg9[%c16, %c0_12], %20 {strides = array<i32>} : memref<144x256xbf16, #tpu.memory_space<vmem>>, vector<4x256xbf16>,
    %c15_i32 = arith.constant 15 : i32
    %22 = tpu.dynamic_rotate %9 by %c15_i32 dim 1 : vector<4x256xf32>, i32 -> vector<4x256xf32>
    %c2 = arith.constant 2 : index
    %c0_13 = arith.constant 0 : index
    %23 = vector.load %arg1[%c2, %c0_13] : memref<9x256xf32, #tpu.memory_space<vmem>>, vector<1x256xf32>
    %24 = vector.broadcast %23 : vector<1x256xf32> to vector<4x256xf32>
    %25 = arith.mulf %22, %24 : vector<4x256xf32>
    %26 = arith.truncf %25 : vector<4x256xf32> to vector<4x256xbf16>
    %c32 = arith.constant 32 : index
    %c0_14 = arith.constant 0 : index
    %27 = vector.load %arg9[%c32, %c0_14] : memref<144x256xbf16, #tpu.memory_space<vmem>>, vector<4x256xbf16>
    tpu.vector_store %arg9[%c32, %c0_14], %26 {strides = array<i32>} : memref<144x256xbf16, #tpu.memory_space<vmem>>, vector<4x256xbf16>,
    %c1_i32 = arith.constant 1 : i32
    %28 = tpu.dynamic_rotate %9 by %c1_i32 dim 1 : vector<4x256xf32>, i32 -> vector<4x256xf32>
    %c3 = arith.constant 3 : index
    %c0_15 = arith.constant 0 : index
    %29 = vector.load %arg1[%c3, %c0_15] : memref<9x256xf32, #tpu.memory_space<vmem>>, vector<1x256xf32>
    %30 = vector.broadcast %29 : vector<1x256xf32> to vector<4x256xf32>
    %31 = arith.mulf %28, %30 : vector<4x256xf32>
    %32 = arith.truncf %31 : vector<4x256xf32> to vector<4x256xbf16>
    %c48 = arith.constant 48 : index
    %c0_16 = arith.constant 0 : index
    %33 = vector.load %arg9[%c48, %c0_16] : memref<144x256xbf16, #tpu.memory_space<vmem>>, vector<4x256xbf16>
    tpu.vector_store %arg9[%c48, %c0_16], %32 {strides = array<i32>} : memref<144x256xbf16, #tpu.memory_space<vmem>>, vector<4x256xbf16>,
    %34 = arith.truncf %9 : vector<4x256xf32> to vector<4x256xbf16>
    %c64 = arith.constant 64 : index
    %c0_17 = arith.constant 0 : index
    %35 = vector.load %arg9[%c64, %c0_17] : memref<144x256xbf16, #tpu.memory_space<vmem>>, vector<4x256xbf16>
    tpu.vector_store %arg9[%c64, %c0_17], %34 {strides = array<i32>} : memref<144x256xbf16, #tpu.memory_space<vmem>>, vector<4x256xbf16>,
    %c255_i32 = arith.constant 255 : i32
    %36 = tpu.dynamic_rotate %9 by %c255_i32 dim 1 : vector<4x256xf32>, i32 -> vector<4x256xf32>
    %c5 = arith.constant 5 : index
    %c0_18 = arith.constant 0 : index
    %37 = vector.load %arg1[%c5, %c0_18] : memref<9x256xf32, #tpu.memory_space<vmem>>, vector<1x256xf32>
    %38 = vector.broadcast %37 : vector<1x256xf32> to vector<4x256xf32>
    %39 = arith.mulf %36, %38 : vector<4x256xf32>
    %40 = arith.truncf %39 : vector<4x256xf32> to vector<4x256xbf16>
    %c80 = arith.constant 80 : index
    %c0_19 = arith.constant 0 : index
    %41 = vector.load %arg9[%c80, %c0_19] : memref<144x256xbf16, #tpu.memory_space<vmem>>, vector<4x256xbf16>
    tpu.vector_store %arg9[%c80, %c0_19], %40 {strides = array<i32>} : memref<144x256xbf16, #tpu.memory_space<vmem>>, vector<4x256xbf16>,
    %c241_i32 = arith.constant 241 : i32
    %42 = tpu.dynamic_rotate %9 by %c241_i32 dim 1 : vector<4x256xf32>, i32 -> vector<4x256xf32>
    %c6 = arith.constant 6 : index
    %c0_20 = arith.constant 0 : index
    %43 = vector.load %arg1[%c6, %c0_20] : memref<9x256xf32, #tpu.memory_space<vmem>>, vector<1x256xf32>
    %44 = vector.broadcast %43 : vector<1x256xf32> to vector<4x256xf32>
    %45 = arith.mulf %42, %44 : vector<4x256xf32>
    %46 = arith.truncf %45 : vector<4x256xf32> to vector<4x256xbf16>
    %c96 = arith.constant 96 : index
    %c0_21 = arith.constant 0 : index
    %47 = vector.load %arg9[%c96, %c0_21] : memref<144x256xbf16, #tpu.memory_space<vmem>>, vector<4x256xbf16>
    tpu.vector_store %arg9[%c96, %c0_21], %46 {strides = array<i32>} : memref<144x256xbf16, #tpu.memory_space<vmem>>, vector<4x256xbf16>,
    %c240_i32 = arith.constant 240 : i32
    %48 = tpu.dynamic_rotate %9 by %c240_i32 dim 1 : vector<4x256xf32>, i32 -> vector<4x256xf32>
    %c7 = arith.constant 7 : index
    %c0_22 = arith.constant 0 : index
    %49 = vector.load %arg1[%c7, %c0_22] : memref<9x256xf32, #tpu.memory_space<vmem>>, vector<1x256xf32>
    %50 = vector.broadcast %49 : vector<1x256xf32> to vector<4x256xf32>
    %51 = arith.mulf %48, %50 : vector<4x256xf32>
    %52 = arith.truncf %51 : vector<4x256xf32> to vector<4x256xbf16>
    %c112 = arith.constant 112 : index
    %c0_23 = arith.constant 0 : index
    %53 = vector.load %arg9[%c112, %c0_23] : memref<144x256xbf16, #tpu.memory_space<vmem>>, vector<4x256xbf16>
    tpu.vector_store %arg9[%c112, %c0_23], %52 {strides = array<i32>} : memref<144x256xbf16, #tpu.memory_space<vmem>>, vector<4x256xbf16>,
    %c239_i32 = arith.constant 239 : i32
    %54 = tpu.dynamic_rotate %9 by %c239_i32 dim 1 : vector<4x256xf32>, i32 -> vector<4x256xf32>
    %c8 = arith.constant 8 : index
    %c0_24 = arith.constant 0 : index
    %55 = vector.load %arg1[%c8, %c0_24] : memref<9x256xf32, #tpu.memory_space<vmem>>, vector<1x256xf32>
    %56 = vector.broadcast %55 : vector<1x256xf32> to vector<4x256xf32>
    %57 = arith.mulf %54, %56 : vector<4x256xf32>
    %58 = arith.truncf %57 : vector<4x256xf32> to vector<4x256xbf16>
    %c128 = arith.constant 128 : index
    %c0_25 = arith.constant 0 : index
    %59 = vector.load %arg9[%c128, %c0_25] : memref<144x256xbf16, #tpu.memory_space<vmem>>, vector<4x256xbf16>
    tpu.vector_store %arg9[%c128, %c0_25], %58 {strides = array<i32>} : memref<144x256xbf16, #tpu.memory_space<vmem>>, vector<4x256xbf16>,
    %c0_26 = arith.constant 0 : index
    %c0_27 = arith.constant 0 : index
    %60 = vector.load %arg3[%c0_26, %c0_27] : memref<8x144xbf16, #tpu.memory_space<vmem>>, vector<8x144xbf16>
    %c0_28 = arith.constant 0 : index
    %c0_29 = arith.constant 0 : index
    %61 = vector.load %arg9[%c0_28, %c0_29] : memref<144x256xbf16, #tpu.memory_space<vmem>>, vector<144x256xbf16>
    %cst_30 = arith.constant dense<0.000000e+00> : vector<8x256xf32>
    %62 = tpu.matmul %60, %61, %cst_30 {dimension_numbers = #tpu.dot_dimension_numbers<[1], [0], [0], [1], [0, 0, 1, 1], [], []>} : vector<8x144xbf16>, vector<144x256xbf16>, vector<8x256xf32> -> vector<8x256xf32>
    %c0_31 = arith.constant 0 : index
    %c0_32 = arith.constant 0 : index
    %63 = vector.load %arg4[%c0_31, %c0_32] : memref<8x1xf32, #tpu.memory_space<vmem>>, vector<8x1xf32>
    %64 = vector.broadcast %63 : vector<8x1xf32> to vector<8x256xf32>
    %65 = arith.addf %62, %64 : vector<8x256xf32>
    %cst_33 = arith.constant 5.000000e-01 : f32
    %66 = vector.broadcast %cst_33 : f32 to vector<8x256xf32>
    %67 = arith.mulf %66, %65 : vector<8x256xf32>
    %c16_i32_34 = arith.constant 16 : i32
    %68 = tpu.dynamic_rotate %65 by %c16_i32_34 dim 1 : vector<8x256xf32>, i32 -> vector<8x256xf32>
    %c1_35 = arith.constant 1 : index
    %c0_36 = arith.constant 0 : index
    %69 = vector.load %arg1[%c1_35, %c0_36] : memref<9x256xf32, #tpu.memory_space<vmem>>, vector<1x256xf32>
    %70 = vector.broadcast %69 : vector<1x256xf32> to vector<8x256xf32>
    %71 = arith.mulf %68, %70 : vector<8x256xf32>
    %c240_i32_37 = arith.constant 240 : i32
    %72 = tpu.dynamic_rotate %65 by %c240_i32_37 dim 1 : vector<8x256xf32>, i32 -> vector<8x256xf32>
    %c7_38 = arith.constant 7 : index
    %c0_39 = arith.constant 0 : index
    %73 = vector.load %arg1[%c7_38, %c0_39] : memref<9x256xf32, #tpu.memory_space<vmem>>, vector<1x256xf32>
    %74 = vector.broadcast %73 : vector<1x256xf32> to vector<8x256xf32>
    %75 = arith.mulf %72, %74 : vector<8x256xf32>
    %76 = arith.addf %71, %75 : vector<8x256xf32>
    %cst_40 = arith.constant 2.500000e-01 : f32
    %77 = vector.broadcast %cst_40 : f32 to vector<8x256xf32>
    %78 = arith.mulf %77, %76 : vector<8x256xf32>
    %79 = arith.addf %67, %78 : vector<8x256xf32>
    %cst_41 = arith.constant 5.000000e-01 : f32
    %80 = vector.broadcast %cst_41 : f32 to vector<8x256xf32>
    %81 = arith.mulf %80, %79 : vector<8x256xf32>
    %c1_i32_42 = arith.constant 1 : i32
    %82 = tpu.dynamic_rotate %79 by %c1_i32_42 dim 1 : vector<8x256xf32>, i32 -> vector<8x256xf32>
    %c3_43 = arith.constant 3 : index
    %c0_44 = arith.constant 0 : index
    %83 = vector.load %arg1[%c3_43, %c0_44] : memref<9x256xf32, #tpu.memory_space<vmem>>, vector<1x256xf32>
    %84 = vector.broadcast %83 : vector<1x256xf32> to vector<8x256xf32>
    %85 = arith.mulf %82, %84 : vector<8x256xf32>
    %c255_i32_45 = arith.constant 255 : i32
    %86 = tpu.dynamic_rotate %79 by %c255_i32_45 dim 1 : vector<8x256xf32>, i32 -> vector<8x256xf32>
    %c5_46 = arith.constant 5 : index
    %c0_47 = arith.constant 0 : index
    %87 = vector.load %arg1[%c5_46, %c0_47] : memref<9x256xf32, #tpu.memory_space<vmem>>, vector<1x256xf32>
    %88 = vector.broadcast %87 : vector<1x256xf32> to vector<8x256xf32>
    %89 = arith.mulf %86, %88 : vector<8x256xf32>
    %90 = arith.addf %85, %89 : vector<8x256xf32>
    %cst_48 = arith.constant 2.500000e-01 : f32
    %91 = vector.broadcast %cst_48 : f32 to vector<8x256xf32>
    %92 = arith.mulf %91, %90 : vector<8x256xf32>
    %93 = arith.addf %81, %92 : vector<8x256xf32>
    %cst_49 = arith.constant 2.000000e-01 : f32
    %94 = vector.broadcast %cst_49 : f32 to vector<8x256xf32>
    %95 = arith.mulf %94, %93 : vector<8x256xf32>
    %96 = arith.maximumf %93, %95 : vector<8x256xf32>
    %cst_50 = arith.constant dense<0.000000e+00> : vector<8xf32>
    %97 = vector.multi_reduction <add>, %96, %cst_50 [1] : vector<8x256xf32> to vector<8xf32>
    %98 = vector.shape_cast %97 : vector<8xf32> to vector<8x1xf32>
    %cst_51 = arith.constant 3.906250e-03 : f32
    %99 = vector.broadcast %cst_51 : f32 to vector<8x1xf32>
    %100 = arith.mulf %98, %99 : vector<8x1xf32>
    %101 = vector.broadcast %100 : vector<8x1xf32> to vector<8x256xf32>
    %102 = arith.subf %96, %101 : vector<8x256xf32>
    %103 = arith.mulf %102, %102 : vector<8x256xf32>
    %cst_52 = arith.constant dense<0.000000e+00> : vector<8xf32>
    %104 = vector.multi_reduction <add>, %103, %cst_52 [1] : vector<8x256xf32> to vector<8xf32>
    %105 = vector.shape_cast %104 : vector<8xf32> to vector<8x1xf32>
    %cst_53 = arith.constant 0.00392156886 : f32
    %106 = vector.broadcast %cst_53 : f32 to vector<8x1xf32>
    %107 = arith.mulf %105, %106 : vector<8x1xf32>
    %108 = math.rsqrt %107 : vector<8x1xf32>
    %109 = arith.mulf %4, %108 : vector<8x1xf32>
    %110 = vector.broadcast %109 : vector<8x1xf32> to vector<8x256xf32>
    %111 = arith.mulf %102, %110 : vector<8x256xf32>
    %112 = vector.broadcast %5 : vector<8x1xf32> to vector<8x256xf32>
    %113 = arith.addf %111, %112 : vector<8x256xf32>
    %c17_i32_54 = arith.constant 17 : i32
    %114 = tpu.dynamic_rotate %113 by %c17_i32_54 dim 1 : vector<8x256xf32>, i32 -> vector<8x256xf32>
    %c0_55 = arith.constant 0 : index
    %c0_56 = arith.constant 0 : index
    %115 = vector.load %arg1[%c0_55, %c0_56] : memref<9x256xf32, #tpu.memory_space<vmem>>, vector<1x256xf32>
    %116 = vector.broadcast %115 : vector<1x256xf32> to vector<8x256xf32>
    %117 = arith.mulf %114, %116 : vector<8x256xf32>
    %118 = arith.truncf %117 : vector<8x256xf32> to vector<8x256xbf16>
    %c0_57 = arith.constant 0 : index
    %c0_58 = arith.constant 0 : index
    %119 = vector.load %arg9[%c0_57, %c0_58] : memref<144x256xbf16, #tpu.memory_space<vmem>>, vector<8x256xbf16>
    tpu.vector_store %arg9[%c0_57, %c0_58], %118 {strides = array<i32>} : memref<144x256xbf16, #tpu.memory_space<vmem>>, vector<8x256xbf16>,
    %c16_i32_59 = arith.constant 16 : i32
    %120 = tpu.dynamic_rotate %113 by %c16_i32_59 dim 1 : vector<8x256xf32>, i32 -> vector<8x256xf32>
    %c1_60 = arith.constant 1 : index
    %c0_61 = arith.constant 0 : index
    %121 = vector.load %arg1[%c1_60, %c0_61] : memref<9x256xf32, #tpu.memory_space<vmem>>, vector<1x256xf32>
    %122 = vector.broadcast %121 : vector<1x256xf32> to vector<8x256xf32>
    %123 = arith.mulf %120, %122 : vector<8x256xf32>
    %124 = arith.truncf %123 : vector<8x256xf32> to vector<8x256xbf16>
    %c16_62 = arith.constant 16 : index
    %c0_63 = arith.constant 0 : index
    %125 = vector.load %arg9[%c16_62, %c0_63] : memref<144x256xbf16, #tpu.memory_space<vmem>>, vector<8x256xbf16>
    tpu.vector_store %arg9[%c16_62, %c0_63], %124 {strides = array<i32>} : memref<144x256xbf16, #tpu.memory_space<vmem>>, vector<8x256xbf16>,
    %c15_i32_64 = arith.constant 15 : i32
    %126 = tpu.dynamic_rotate %113 by %c15_i32_64 dim 1 : vector<8x256xf32>, i32 -> vector<8x256xf32>
    %c2_65 = arith.constant 2 : index
    %c0_66 = arith.constant 0 : index
    %127 = vector.load %arg1[%c2_65, %c0_66] : memref<9x256xf32, #tpu.memory_space<vmem>>, vector<1x256xf32>
    %128 = vector.broadcast %127 : vector<1x256xf32> to vector<8x256xf32>
    %129 = arith.mulf %126, %128 : vector<8x256xf32>
    %130 = arith.truncf %129 : vector<8x256xf32> to vector<8x256xbf16>
    %c32_67 = arith.constant 32 : index
    %c0_68 = arith.constant 0 : index
    %131 = vector.load %arg9[%c32_67, %c0_68] : memref<144x256xbf16, #tpu.memory_space<vmem>>, vector<8x256xbf16>
    tpu.vector_store %arg9[%c32_67, %c0_68], %130 {strides = array<i32>} : memref<144x256xbf16, #tpu.memory_space<vmem>>, vector<8x256xbf16>,
    %c1_i32_69 = arith.constant 1 : i32
    %132 = tpu.dynamic_rotate %113 by %c1_i32_69 dim 1 : vector<8x256xf32>, i32 -> vector<8x256xf32>
    %c3_70 = arith.constant 3 : index
    %c0_71 = arith.constant 0 : index
    %133 = vector.load %arg1[%c3_70, %c0_71] : memref<9x256xf32, #tpu.memory_space<vmem>>, vector<1x256xf32>
    %134 = vector.broadcast %133 : vector<1x256xf32> to vector<8x256xf32>
    %135 = arith.mulf %132, %134 : vector<8x256xf32>
    %136 = arith.truncf %135 : vector<8x256xf32> to vector<8x256xbf16>
    %c48_72 = arith.constant 48 : index
    %c0_73 = arith.constant 0 : index
    %137 = vector.load %arg9[%c48_72, %c0_73] : memref<144x256xbf16, #tpu.memory_space<vmem>>, vector<8x256xbf16>
    tpu.vector_store %arg9[%c48_72, %c0_73], %136 {strides = array<i32>} : memref<144x256xbf16, #tpu.memory_space<vmem>>, vector<8x256xbf16>,
    %138 = arith.truncf %113 : vector<8x256xf32> to vector<8x256xbf16>
    %c64_74 = arith.constant 64 : index
    %c0_75 = arith.constant 0 : index
    %139 = vector.load %arg9[%c64_74, %c0_75] : memref<144x256xbf16, #tpu.memory_space<vmem>>, vector<8x256xbf16>
    tpu.vector_store %arg9[%c64_74, %c0_75], %138 {strides = array<i32>} : memref<144x256xbf16, #tpu.memory_space<vmem>>, vector<8x256xbf16>,
    %c255_i32_76 = arith.constant 255 : i32
    %140 = tpu.dynamic_rotate %113 by %c255_i32_76 dim 1 : vector<8x256xf32>, i32 -> vector<8x256xf32>
    %c5_77 = arith.constant 5 : index
    %c0_78 = arith.constant 0 : index
    %141 = vector.load %arg1[%c5_77, %c0_78] : memref<9x256xf32, #tpu.memory_space<vmem>>, vector<1x256xf32>
    %142 = vector.broadcast %141 : vector<1x256xf32> to vector<8x256xf32>
    %143 = arith.mulf %140, %142 : vector<8x256xf32>
    %144 = arith.truncf %143 : vector<8x256xf32> to vector<8x256xbf16>
    %c80_79 = arith.constant 80 : index
    %c0_80 = arith.constant 0 : index
    %145 = vector.load %arg9[%c80_79, %c0_80] : memref<144x256xbf16, #tpu.memory_space<vmem>>, vector<8x256xbf16>
    tpu.vector_store %arg9[%c80_79, %c0_80], %144 {strides = array<i32>} : memref<144x256xbf16, #tpu.memory_space<vmem>>, vector<8x256xbf16>,
    %c241_i32_81 = arith.constant 241 : i32
    %146 = tpu.dynamic_rotate %113 by %c241_i32_81 dim 1 : vector<8x256xf32>, i32 -> vector<8x256xf32>
    %c6_82 = arith.constant 6 : index
    %c0_83 = arith.constant 0 : index
    %147 = vector.load %arg1[%c6_82, %c0_83] : memref<9x256xf32, #tpu.memory_space<vmem>>, vector<1x256xf32>
    %148 = vector.broadcast %147 : vector<1x256xf32> to vector<8x256xf32>
    %149 = arith.mulf %146, %148 : vector<8x256xf32>
    %150 = arith.truncf %149 : vector<8x256xf32> to vector<8x256xbf16>
    %c96_84 = arith.constant 96 : index
    %c0_85 = arith.constant 0 : index
    %151 = vector.load %arg9[%c96_84, %c0_85] : memref<144x256xbf16, #tpu.memory_space<vmem>>, vector<8x256xbf16>
    tpu.vector_store %arg9[%c96_84, %c0_85], %150 {strides = array<i32>} : memref<144x256xbf16, #tpu.memory_space<vmem>>, vector<8x256xbf16>,
    %c240_i32_86 = arith.constant 240 : i32
    %152 = tpu.dynamic_rotate %113 by %c240_i32_86 dim 1 : vector<8x256xf32>, i32 -> vector<8x256xf32>
    %c7_87 = arith.constant 7 : index
    %c0_88 = arith.constant 0 : index
    %153 = vector.load %arg1[%c7_87, %c0_88] : memref<9x256xf32, #tpu.memory_space<vmem>>, vector<1x256xf32>
    %154 = vector.broadcast %153 : vector<1x256xf32> to vector<8x256xf32>
    %155 = arith.mulf %152, %154 : vector<8x256xf32>
    %156 = arith.truncf %155 : vector<8x256xf32> to vector<8x256xbf16>
    %c112_89 = arith.constant 112 : index
    %c0_90 = arith.constant 0 : index
    %157 = vector.load %arg9[%c112_89, %c0_90] : memref<144x256xbf16, #tpu.memory_space<vmem>>, vector<8x256xbf16>
    tpu.vector_store %arg9[%c112_89, %c0_90], %156 {strides = array<i32>} : memref<144x256xbf16, #tpu.memory_space<vmem>>, vector<8x256xbf16>,
    %c239_i32_91 = arith.constant 239 : i32
    %158 = tpu.dynamic_rotate %113 by %c239_i32_91 dim 1 : vector<8x256xf32>, i32 -> vector<8x256xf32>
    %c8_92 = arith.constant 8 : index
    %c0_93 = arith.constant 0 : index
    %159 = vector.load %arg1[%c8_92, %c0_93] : memref<9x256xf32, #tpu.memory_space<vmem>>, vector<1x256xf32>
    %160 = vector.broadcast %159 : vector<1x256xf32> to vector<8x256xf32>
    %161 = arith.mulf %158, %160 : vector<8x256xf32>
    %162 = arith.truncf %161 : vector<8x256xf32> to vector<8x256xbf16>
    %c128_94 = arith.constant 128 : index
    %c0_95 = arith.constant 0 : index
    %163 = vector.load %arg9[%c128_94, %c0_95] : memref<144x256xbf16, #tpu.memory_space<vmem>>, vector<8x256xbf16>
    tpu.vector_store %arg9[%c128_94, %c0_95], %162 {strides = array<i32>} : memref<144x256xbf16, #tpu.memory_space<vmem>>, vector<8x256xbf16>,
    %c0_96 = arith.constant 0 : index
    %c0_97 = arith.constant 0 : index
    %164 = vector.load %arg5[%c0_96, %c0_97] : memref<8x144xbf16, #tpu.memory_space<vmem>>, vector<8x144xbf16>
    %c0_98 = arith.constant 0 : index
    %c0_99 = arith.constant 0 : index
    %165 = vector.load %arg9[%c0_98, %c0_99] : memref<144x256xbf16, #tpu.memory_space<vmem>>, vector<144x256xbf16>
    %cst_100 = arith.constant dense<0.000000e+00> : vector<8x256xf32>
    %166 = tpu.matmul %164, %165, %cst_100 {dimension_numbers = #tpu.dot_dimension_numbers<[1], [0], [0], [1], [0, 0, 1, 1], [], []>} : vector<8x144xbf16>, vector<144x256xbf16>, vector<8x256xf32> -> vector<8x256xf32>
    %c0_101 = arith.constant 0 : index
    %c0_102 = arith.constant 0 : index
    %167 = vector.load %arg6[%c0_101, %c0_102] : memref<8x1xf32, #tpu.memory_space<vmem>>, vector<8x1xf32>
    %168 = vector.broadcast %167 : vector<8x1xf32> to vector<8x256xf32>
    %169 = arith.addf %166, %168 : vector<8x256xf32>
    %cst_103 = arith.constant 2.000000e-01 : f32
    %170 = vector.broadcast %cst_103 : f32 to vector<8x256xf32>
    %171 = arith.mulf %170, %169 : vector<8x256xf32>
    %172 = arith.maximumf %169, %171 : vector<8x256xf32>
    %cst_104 = arith.constant dense<0.000000e+00> : vector<8xf32>
    %173 = vector.multi_reduction <add>, %172, %cst_104 [1] : vector<8x256xf32> to vector<8xf32>
    %174 = vector.shape_cast %173 : vector<8xf32> to vector<8x1xf32>
    %cst_105 = arith.constant 3.906250e-03 : f32
    %175 = vector.broadcast %cst_105 : f32 to vector<8x1xf32>
    %176 = arith.mulf %174, %175 : vector<8x1xf32>
    %177 = vector.broadcast %176 : vector<8x1xf32> to vector<8x256xf32>
    %178 = arith.subf %172, %177 : vector<8x256xf32>
    %179 = arith.mulf %178, %178 : vector<8x256xf32>
    %cst_106 = arith.constant dense<0.000000e+00> : vector<8xf32>
    %180 = vector.multi_reduction <add>, %179, %cst_106 [1] : vector<8x256xf32> to vector<8xf32>
    %181 = vector.shape_cast %180 : vector<8xf32> to vector<8x1xf32>
    %cst_107 = arith.constant 0.00392156886 : f32
    %182 = vector.broadcast %cst_107 : f32 to vector<8x1xf32>
    %183 = arith.mulf %181, %182 : vector<8x1xf32>
    %184 = math.rsqrt %183 : vector<8x1xf32>
    %185 = arith.mulf %6, %184 : vector<8x1xf32>
    %186 = vector.broadcast %185 : vector<8x1xf32> to vector<8x256xf32>
    %187 = arith.mulf %178, %186 : vector<8x256xf32>
    %188 = vector.broadcast %7 : vector<8x1xf32> to vector<8x256xf32>
    %189 = arith.addf %187, %188 : vector<8x256xf32>
    %c0_108 = arith.constant 0 : index
    %c0_109 = arith.constant 0 : index
    %c0_110 = arith.constant 0 : index
    %190 = vector.load %arg8[%c0_108, %c0_109, %c0_110] : memref<1x8x256xf32, #tpu.memory_space<vmem>>, vector<1x8x256xf32>
    %191 = vector.shape_cast %190 : vector<1x8x256xf32> to vector<8x256xf32>
    %192 = vector.shape_cast %189 : vector<8x256xf32> to vector<1x8x256xf32>
    tpu.vector_store %arg8[%c0_108, %c0_109, %c0_110], %192 {strides = array<i32>} : memref<1x8x256xf32, #tpu.memory_space<vmem>>, vector<1x8x256xf32>,
    return
  }
  func.func @transform_0(%arg0: i32) -> (i32, i32) {
    %c0_i32 = arith.constant 0 : i32
    %c0_i32_0 = arith.constant 0 : i32
    %c0_i32_1 = arith.constant 0 : i32
    return %c0_i32, %c0_i32_0 : i32, i32
  }
  func.func @transform_1(%arg0: i32) -> (i32, i32, i32) {
    %c0_i32 = arith.constant 0 : i32
    %c0_i32_0 = arith.constant 0 : i32
    %c0_i32_1 = arith.constant 0 : i32
    return %arg0, %c0_i32, %c0_i32_0 : i32, i32, i32
  }
  func.func @transform_2(%arg0: i32) -> (i32, i32) {
    %c0_i32 = arith.constant 0 : i32
    %c0_i32_0 = arith.constant 0 : i32
    %c0_i32_1 = arith.constant 0 : i32
    return %c0_i32, %c0_i32_0 : i32, i32
  }
  func.func @transform_3(%arg0: i32) -> (i32, i32) {
    %c0_i32 = arith.constant 0 : i32
    %c0_i32_0 = arith.constant 0 : i32
    %c0_i32_1 = arith.constant 0 : i32
    return %c0_i32, %c0_i32_0 : i32, i32
  }
  func.func @transform_4(%arg0: i32) -> (i32, i32) {
    %c0_i32 = arith.constant 0 : i32
    %c0_i32_0 = arith.constant 0 : i32
    %c0_i32_1 = arith.constant 0 : i32
    return %c0_i32, %c0_i32_0 : i32, i32
  }
  func.func @transform_5(%arg0: i32) -> (i32, i32) {
    %c0_i32 = arith.constant 0 : i32
    %c0_i32_0 = arith.constant 0 : i32
    %c0_i32_1 = arith.constant 0 : i32
    return %c0_i32, %c0_i32_0 : i32, i32
  }
  func.func @transform_6(%arg0: i32) -> (i32, i32, i32) {
    %c0_i32 = arith.constant 0 : i32
    %c0_i32_0 = arith.constant 0 : i32
    %c0_i32_1 = arith.constant 0 : i32
    return %arg0, %c0_i32, %c0_i32_0 : i32, i32, i32
  }
  func.func @transform_7(%arg0: i32) -> (i32, i32, i32) {
    %c0_i32 = arith.constant 0 : i32
    %c0_i32_0 = arith.constant 0 : i32
    %c0_i32_1 = arith.constant 0 : i32
    return %arg0, %c0_i32, %c0_i32_0 : i32, i32, i32
  }
}

</mosaic_0001>

<llo_original>
// kernel: tpu_custom_call.1
$region0: #{tpu_custom_call.1}
  #allocation0 [shape = 'u32[]', space=smem, size = 0x4, offset = 0x4, fixed_abs, tag = 'smem constant byte address 0x4 - core index']
  #allocation1 [shape = 'u32[144,128]{1,0:T(1,128)}', space=vmem, size = 0x12000, scoped, tag = 'internal scratch']
  #allocation2 [shape = 'bf16[144,256]{1,0:T(8,128)(2,1)}', space=vmem, size = 0x12000, scoped, tag = 'scratch operand']
  %s0 = inlined_call_operand.vmem [shape: f32[9,256], index: 0, kind: input, shape index: {}]
  %s1 = inlined_call_operand.hbm [shape: f32[2,4,256], index: 1, kind: input, shape index: {}]
  %s2 = inlined_call_operand.vmem [shape: bf16[8,144], index: 2, kind: input, shape index: {}]
  %s3 = inlined_call_operand.vmem [shape: f32[8,1], index: 3, kind: input, shape index: {}]
  %s4 = inlined_call_operand.vmem [shape: bf16[8,144], index: 4, kind: input, shape index: {}]
  %s5 = inlined_call_operand.vmem [shape: f32[8,1], index: 5, kind: input, shape index: {}]
  %s6 = inlined_call_operand.vmem [shape: f32[2,8,4], index: 6, kind: input, shape index: {}]
  %s7 = inlined_call_operand.hbm [shape: f32[2,8,256], index: 7, kind: output, shape index: {}]
  %s8 = sld [smem:[#allocation0]]
  $region65: #{tpu_custom_call.1} parent=0
    _
  %s10 = ssub.s32 1, %s8
  %s11 = scalar_select 0, %s10, %s8
  $region1: #{tpu_custom_call.1} parent=0
    #allocation3 [shape = 'u8[8192]{0}', space=vmem, size = 0x2000, scoped, tag = 'input window, operand 1']
    #allocation4 [shape = 's32[2]{0}', space=sflag, size = 0x8, scoped, tag = 'scoped memory for tpu_custom_call.1']
    #allocation5 [shape = 's32[2]{0}', space=sflag, size = 0x8, scoped, tag = 'scoped memory for tpu_custom_call.1']
    #allocation6 [shape = 'u8[16384]{0}', space=vmem, size = 0x4000, scoped, tag = 'output window, operand 0']
    %12 = vsyncpa [#allocation4], 0
    %s13 = scalar_lea.sflag [#allocation4], 1
    %14 = vsyncpa %s13, 0
    %15 = vsyncpa [#allocation5], 0
    %s16 = scalar_lea.sflag [#allocation5], 1
    %17 = vsyncpa %s16, 0
    loop: start=0, step=1, limit=4
    $region2: #{tpu_custom_call.1} parent=1 // loop_pre_header
      _
    $region3: #{tpu_custom_call.1} parent=1 // loop_header
      %s19 = sphi 0, %s23
      %p20 = scmp.ge.s32.totalorder %s19, 4
      %s27 = sphi 0, %s27
      %s29 = sphi 0, %s27
      %s30 = sphi 0, %s29
      %s44 = sphi 0, %s30
      %s50 = sphi 0, %s52
      %s53 = sphi 0, %s50
      %s54 = sphi 0, %s53
      %s70 = sphi 0, %s54
      %s74 = sphi 0, %s74
      %s76 = sphi 0, %s74
      %s77 = sphi 0, %s76
      %s91 = sphi 0, %s77
      %s95 = sphi 0, %s95
      %s97 = sphi 0, %s95
      %s98 = sphi 0, %s97
      %s112 = sphi 0, %s98
      %s116 = sphi 0, %s116
      %s118 = sphi 0, %s116
      %s119 = sphi 0, %s118
      %s133 = sphi 0, %s119
      %s137 = sphi 0, %s137
      %s139 = sphi 0, %s137
      %s140 = sphi 0, %s139
      %s154 = sphi 0, %s140
      %s160 = sphi 0, %s162
      %s163 = sphi 0, %s160
      %s164 = sphi 0, %s163
      %s180 = sphi 0, %s164
      %s186 = sphi 0, %s188
      %s189 = sphi 0, %s186
      %s190 = sphi 0, %s189
      %s206 = sphi 0, %s190
    $region4: #{tpu_custom_call.1} parent=1 // loop_header_branch
      %22 = sbr.rel (%p20) target = $region8
    $region5: #{tpu_custom_call.1} parent=1 // loop_body
      %s24 = ssub.s32 %s19, 1
      %s25 = ssub.s32 %s19, 2
      %s26 = sadd.s32 %s19, 1
      %s28 = sadd.s32 %s27, 1
      %p31 = scmp.eq.s32.totalorder %s19, 1
      %p32 = scmp.ne.s32.totalorder %s27, %s29
      %p33 = scmp.eq.s32.totalorder %s19, 0
      %p34 = por %p32, %p33
      %p35 = scmp.ne.s32.totalorder %s27, %s29
      %p36 = scmp.eq.s32.totalorder %s24, 1
      %p37 = por %p35, %p36
      %p38 = scmp.ne.s32.totalorder %s29, %s30
      %p39 = scmp.eq.s32.totalorder %s24, 0
      %p40 = por %p38, %p39
      %p41 = scmp.ne.s32.totalorder %s29, %s30
      %p42 = scmp.eq.s32.totalorder %s25, 1
      %p43 = por %p41, %p42
      %p45 = scmp.ne.s32.totalorder %s30, %s44
      %p46 = scmp.eq.s32.totalorder %s25, 0
      %p47 = por %p45, %p46
      %s48 = ssub.s32 %s19, %s26
      %p49 = scmp.eq.s32.totalorder %s48, 0
      %s51 = sadd.s32 %s50, 1
      %s52 = scalar_select %p49, %s50, %s51
      %p55 = pneg %p49
      %p56 = scmp.eq.s32.totalorder %s19, 1
      %p57 = por %p55, %p56
      %p58 = scmp.ne.s32.totalorder %s50, %s53
      %p59 = scmp.eq.s32.totalorder %s19, 0
      %p60 = por %p58, %p59
      %p61 = scmp.ne.s32.totalorder %s50, %s53
      %p62 = scmp.eq.s32.totalorder %s24, 1
      %p63 = por %p61, %p62
      %p64 = scmp.ne.s32.totalorder %s53, %s54
      %p65 = scmp.eq.s32.totalorder %s24, 0
      %p66 = por %p64, %p65
      %p67 = scmp.ne.s32.totalorder %s53, %s54
      %p68 = scmp.eq.s32.totalorder %s25, 1
      %p69 = por %p67, %p68
      %p71 = scmp.ne.s32.totalorder %s54, %s70
      %p72 = scmp.eq.s32.totalorder %s25, 0
      %p73 = por %p71, %p72
      %s75 = sadd.s32 %s74, 1
      %p78 = scmp.eq.s32.totalorder %s19, 1
      %p79 = scmp.ne.s32.totalorder %s74, %s76
      %p80 = scmp.eq.s32.totalorder %s19, 0
      %p81 = por %p79, %p80
      %p82 = scmp.ne.s32.totalorder %s74, %s76
      %p83 = scmp.eq.s32.totalorder %s24, 1
      %p84 = por %p82, %p83
      %p85 = scmp.ne.s32.totalorder %s76, %s77
      %p86 = scmp.eq.s32.totalorder %s24, 0
      %p87 = por %p85, %p86
      %p88 = scmp.ne.s32.totalorder %s76, %s77
      %p89 = scmp.eq.s32.totalorder %s25, 1
      %p90 = por %p88, %p89
      %p92 = scmp.ne.s32.totalorder %s77, %s91
      %p93 = scmp.eq.s32.totalorder %s25, 0
      %p94 = por %p92, %p93
      %s96 = sadd.s32 %s95, 1
      %p99 = scmp.eq.s32.totalorder %s19, 1
      %p100 = scmp.ne.s32.totalorder %s95, %s97
      %p101 = scmp.eq.s32.totalorder %s19, 0
      %p102 = por %p100, %p101
      %p103 = scmp.ne.s32.totalorder %s95, %s97
      %p104 = scmp.eq.s32.totalorder %s24, 1
      %p105 = por %p103, %p104
      %p106 = scmp.ne.s32.totalorder %s97, %s98
      %p107 = scmp.eq.s32.totalorder %s24, 0
      %p108 = por %p106, %p107
      %p109 = scmp.ne.s32.totalorder %s97, %s98
      %p110 = scmp.eq.s32.totalorder %s25, 1
      %p111 = por %p109, %p110
      %p113 = scmp.ne.s32.totalorder %s98, %s112
      %p114 = scmp.eq.s32.totalorder %s25, 0
      %p115 = por %p113, %p114
      %s117 = sadd.s32 %s116, 1
      %p120 = scmp.eq.s32.totalorder %s19, 1
      %p121 = scmp.ne.s32.totalorder %s116, %s118
      %p122 = scmp.eq.s32.totalorder %s19, 0
      %p123 = por %p121, %p122
      %p124 = scmp.ne.s32.totalorder %s116, %s118
      %p125 = scmp.eq.s32.totalorder %s24, 1
      %p126 = por %p124, %p125
      %p127 = scmp.ne.s32.totalorder %s118, %s119
      %p128 = scmp.eq.s32.totalorder %s24, 0
      %p129 = por %p127, %p128
      %p130 = scmp.ne.s32.totalorder %s118, %s119
      %p131 = scmp.eq.s32.totalorder %s25, 1
      %p132 = por %p130, %p131
      %p134 = scmp.ne.s32.totalorder %s119, %s133
      %p135 = scmp.eq.s32.totalorder %s25, 0
      %p136 = por %p134, %p135
      %s138 = sadd.s32 %s137, 1
      %p141 = scmp.eq.s32.totalorder %s19, 1
      %p142 = scmp.ne.s32.totalorder %s137, %s139
      %p143 = scmp.eq.s32.totalorder %s19, 0
      %p144 = por %p142, %p143
      %p145 = scmp.ne.s32.totalorder %s137, %s139
      %p146 = scmp.eq.s32.totalorder %s24, 1
      %p147 = por %p145, %p146
      %p148 = scmp.ne.s32.totalorder %s139, %s140
      %p149 = scmp.eq.s32.totalorder %s24, 0
      %p150 = por %p148, %p149
      %p151 = scmp.ne.s32.totalorder %s139, %s140
      %p152 = scmp.eq.s32.totalorder %s25, 1
      %p153 = por %p151, %p152
      %p155 = scmp.ne.s32.totalorder %s140, %s154
      %p156 = scmp.eq.s32.totalorder %s25, 0
      %p157 = por %p155, %p156
      %s158 = ssub.s32 %s19, %s26
      %p159 = scmp.eq.s32.totalorder %s158, 0
      %s161 = sadd.s32 %s160, 1
      %s162 = scalar_select %p159, %s160, %s161
      %p165 = pneg %p159
      %p166 = scmp.eq.s32.totalorder %s19, 1
      %p167 = por %p165, %p166
      %p168 = scmp.ne.s32.totalorder %s160, %s163
      %p169 = scmp.eq.s32.totalorder %s19, 0
      %p170 = por %p168, %p169
      %p171 = scmp.ne.s32.totalorder %s160, %s163
      %p172 = scmp.eq.s32.totalorder %s24, 1
      %p173 = por %p171, %p172
      %p174 = scmp.ne.s32.totalorder %s163, %s164
      %p175 = scmp.eq.s32.totalorder %s24, 0
      %p176 = por %p174, %p175
      %p177 = scmp.ne.s32.totalorder %s163, %s164
      %p178 = scmp.eq.s32.totalorder %s25, 1
      %p179 = por %p177, %p178
      %p181 = scmp.ne.s32.totalorder %s164, %s180
      %p182 = scmp.eq.s32.totalorder %s25, 0
      %p183 = por %p181, %p182
      %s184 = ssub.s32 %s19, %s26
      %p185 = scmp.eq.s32.totalorder %s184, 0
      %s187 = sadd.s32 %s186, 1
      %s188 = scalar_select %p185, %s186, %s187
      %p191 = pneg %p185
      %p192 = scmp.eq.s32.totalorder %s19, 1
      %p193 = por %p191, %p192
      %p194 = scmp.ne.s32.totalorder %s186, %s189
      %p195 = scmp.eq.s32.totalorder %s19, 0
      %p196 = por %p194, %p195
      %p197 = scmp.ne.s32.totalorder %s186, %s189
      %p198 = scmp.eq.s32.totalorder %s24, 1
      %p199 = por %p197, %p198
      %p200 = scmp.ne.s32.totalorder %s189, %s190
      %p201 = scmp.eq.s32.totalorder %s24, 0
      %p202 = por %p200, %p201
      %p203 = scmp.ne.s32.totalorder %s189, %s190
      %p204 = scmp.eq.s32.totalorder %s25, 1
      %p205 = por %p203, %p204
      %p207 = scmp.ne.s32.totalorder %s190, %s206
      %p208 = scmp.eq.s32.totalorder %s25, 0
      %p209 = por %p207, %p208
      %p210 = scmp.le.s32.totalorder 1, %s19
      %p211 = scmp.lt.s32.totalorder %s19, 3
      %p212 = pnand %p210, %p211
      %p213 = pneg %p212
      // Predicated region
      $region9: #{tpu_custom_call.1} parent=5 // pred_check
        _
      $region10: #{tpu_custom_call.1} parent=5 // pred_check_branch
        %215 = sbr.rel (%p212) target = $region12
      $region11: #{tpu_custom_call.1} parent=5 // pred_region
        %s216 = ssub.s32 %s19, 1
        // Predicated region
        $region13: #{tpu_custom_call.1} parent=11 // pred_check
          %p217 = pneg %p40
        $region14: #{tpu_custom_call.1} parent=11 // pred_check_branch
          %219 = sbr.rel (%p217) target = $region16
        $region15: #{tpu_custom_call.1} parent=11 // pred_region
          _
        $region16: #{tpu_custom_call.1} parent=11 // pred_fallthru
          _
        // Predicated region
        $region17: #{tpu_custom_call.1} parent=11 // pred_check
          %p220 = pneg %p87
        $region18: #{tpu_custom_call.1} parent=11 // pred_check_branch
          %222 = sbr.rel (%p220) target = $region20
        $region19: #{tpu_custom_call.1} parent=11 // pred_region
          _
        $region20: #{tpu_custom_call.1} parent=11 // pred_fallthru
          _
        // Predicated region
        $region21: #{tpu_custom_call.1} parent=11 // pred_check
          %p223 = pneg %p108
        $region22: #{tpu_custom_call.1} parent=11 // pred_check_branch
          %225 = sbr.rel (%p223) target = $region24
        $region23: #{tpu_custom_call.1} parent=11 // pred_region
          _
        $region24: #{tpu_custom_call.1} parent=11 // pred_fallthru
          _
        // Predicated region
        $region25: #{tpu_custom_call.1} parent=11 // pred_check
          %p226 = pneg %p129
        $region26: #{tpu_custom_call.1} parent=11 // pred_check_branch
          %228 = sbr.rel (%p226) target = $region28
        $region27: #{tpu_custom_call.1} parent=11 // pred_region
          _
        $region28: #{tpu_custom_call.1} parent=11 // pred_fallthru
          _
        // Predicated region
        $region29: #{tpu_custom_call.1} parent=11 // pred_check
          %p229 = pneg %p150
        $region30: #{tpu_custom_call.1} parent=11 // pred_check_branch
          %231 = sbr.rel (%p229) target = $region32
        $region31: #{tpu_custom_call.1} parent=11 // pred_region
          _
        $region32: #{tpu_custom_call.1} parent=11 // pred_fallthru
          _
      $region12: #{tpu_custom_call.1} parent=5 // pred_fallthru
        _
      %p232 = scmp.lt.s32.totalorder %s19, 2
      // Predicated region
      $region33: #{tpu_custom_call.1} parent=5 // pred_check
        %p233 = pneg %p232
      $region34: #{tpu_custom_call.1} parent=5 // pred_check_branch
        %235 = sbr.rel (%p233) target = $region36
      $region35: #{tpu_custom_call.1} parent=5 // pred_region
        // Predicated region
        $region37: #{tpu_custom_call.1} parent=35 // pred_check
          %p236 = pneg %p60
        $region38: #{tpu_custom_call.1} parent=35 // pred_check_branch
          %238 = sbr.rel (%p236) target = $region40
        $region39: #{tpu_custom_call.1} parent=35 // pred_region
          %s239 = sand.u32 %s50, 1
          %s240 = scalar_lea.sflag [#allocation4], %s239
          %s241 = sand.u32 %s50, 1
          %s242 = smul.addr %s241, 8
          %s243 = scalar_lea.vmem [#allocation3], %s242
          %s245 = ssub.s32 128, 128
          %246 = vsyncadd %s240, %s245
          %s247 = smul.addr %s19, 2
          %s248 = smul.addr %s247, 64
          %s249 = scalar_lea.hbm %s1, %s248
          %s251 = sshll.u32 %s243, 4
          %s252 = int_to_ptr.vmem [resolvable:$true] %s251
          %254 = dma.hbm_to_vmem [thread:$0]  %s249, 128, %s252, %s240
        $region40: #{tpu_custom_call.1} parent=35 // pred_fallthru
          _
        // Predicated region
        $region41: #{tpu_custom_call.1} parent=35 // pred_check
          %p255 = pneg %p170
        $region42: #{tpu_custom_call.1} parent=35 // pred_check_branch
          %257 = sbr.rel (%p255) target = $region44
        $region43: #{tpu_custom_call.1} parent=35 // pred_region
          %p258 = scmp.lt.s32.totalorder %s19, 1
          %s259 = scalar_select %p258, %s19, 1
          %s260 = smul.addr %s259, 8
          %s261 = scalar_lea.vmem %s6, %s260
        $region44: #{tpu_custom_call.1} parent=35 // pred_fallthru
          _
      $region36: #{tpu_custom_call.1} parent=5 // pred_fallthru
        _
      %p262 = scmp.le.s32.totalorder 1, %s19
      %p263 = scmp.lt.s32.totalorder %s19, 3
      %p264 = pnand %p262, %p263
      %p265 = pneg %p264
      // Predicated region
      $region45: #{tpu_custom_call.1} parent=5 // pred_check
        _
      $region46: #{tpu_custom_call.1} parent=5 // pred_check_branch
        %267 = sbr.rel (%p264) target = $region48
      $region47: #{tpu_custom_call.1} parent=5 // pred_region
        %s268 = ssub.s32 %s19, 1
        %s269 = sand.u32 %s53, 1
        %s270 = scalar_lea.sflag [#allocation4], %s269
        %s271 = sand.u32 %s53, 1
        %s272 = smul.addr %s271, 8
        %s273 = scalar_lea.vmem [#allocation3], %s272
        // Predicated region
        $region49: #{tpu_custom_call.1} parent=47 // pred_check
          %p274 = pneg %p66
        $region50: #{tpu_custom_call.1} parent=47 // pred_check_branch
          %276 = sbr.rel (%p274) target = $region52
        $region51: #{tpu_custom_call.1} parent=47 // pred_region
          %277 = dma.done %s270, 128
        $region52: #{tpu_custom_call.1} parent=47 // pred_fallthru
          _
        %p278 = pneg %p40
        %p279 = pneg %p37
        %s280 = sand.u32 %s53, 1
        %s281 = scalar_lea.sflag [#allocation4], %s280
        %s282 = sand.u32 %s53, 1
        %s283 = smul.addr %s282, 8
        %s284 = scalar_lea.vmem [#allocation3], %s283
        %p285 = pneg %p66
        %p286 = pneg %p63
        %p287 = pneg %p87
        %p288 = pneg %p84
        %p289 = pneg %p108
        %p290 = pneg %p105
        %p291 = pneg %p129
        %p292 = pneg %p126
        %p293 = pneg %p150
        %p294 = pneg %p147
        %p295 = scmp.lt.s32.totalorder %s24, 1
        %s296 = scalar_select %p295, %s24, 1
        %s297 = smul.addr %s296, 8
        %s298 = scalar_lea.vmem %s6, %s297
        %p299 = pneg %p176
        %p300 = pneg %p173
        %p301 = pneg %p202
        %p302 = pneg %p199
        %s303 = sand.u32 %s189, 1
        %s304 = scalar_lea.sflag [#allocation5], %s303
        %s305 = sand.u32 %s189, 1
        %s306 = smul.addr %s305, 16
        %s307 = scalar_lea.vmem [#allocation6], %s306
        %p308 = scmp.lt.s32.totalorder %s24, 1
        %s309 = scalar_select %p308, %s24, 1
        %s310 = smul.addr %s309, 8
        %s311 = scalar_lea.vmem %s6, %s310
        %313 = vst [vmem:[#allocation2] sm:$0xff] 0
        %314 = vst [vmem:[#allocation2 + $0x8] sm:$0xff] 0
        %315 = vst [vmem:[#allocation2 + $0x10] sm:$0xff] 0
        %316 = vst [vmem:[#allocation2 + $0x18] sm:$0xff] 0
        %317 = vst [vmem:[#allocation2 + $0x20] sm:$0xff] 0
        %318 = vst [vmem:[#allocation2 + $0x28] sm:$0xff] 0
        %319 = vst [vmem:[#allocation2 + $0x30] sm:$0xff] 0
        %320 = vst [vmem:[#allocation2 + $0x38] sm:$0xff] 0
        %321 = vst [vmem:[#allocation2 + $0x40] sm:$0xff] 0
        %322 = vst [vmem:[#allocation2 + $0x48] sm:$0xff] 0
        %323 = vst [vmem:[#allocation2 + $0x50] sm:$0xff] 0
        %324 = vst [vmem:[#allocation2 + $0x58] sm:$0xff] 0
        %325 = vst [vmem:[#allocation2 + $0x60] sm:$0xff] 0
        %326 = vst [vmem:[#allocation2 + $0x68] sm:$0xff] 0
        %327 = vst [vmem:[#allocation2 + $0x70] sm:$0xff] 0
        %328 = vst [vmem:[#allocation2 + $0x78] sm:$0xff] 0
        %329 = vst [vmem:[#allocation2 + $0x80] sm:$0xff] 0
        %330 = vst [vmem:[#allocation2 + $0x88] sm:$0xff] 0
        %v331 = vld [vmem:[%s311] sm:$0xff]
        %v332 = vld [vmem:[%s273] sm:$0xff]
        %v334 = vcombine.high %v332, %v332
        %336 = vrot.lane.b32.xlu0 %v332, 17
        %v337 = vpop.permute.xlu0 %336
        %338 = vrot.lane.b32.xlu0 %v334, 17
        %v339 = vpop.permute.xlu0 %338
        %v340 = vlaneseq
        %v341 = vand.u32 %v340, 127
        %vm342 = vcmp.lt.s32.totalorder %v341, 17
        %v343 = vsel %vm342, %v337, %v339
        %v344 = vsel %vm342, %v339, %v337
        %v345 = vld [vmem:[%s0] ss:$8 sm:$0x3]
        %v347 = vlaneseq
        %v348 = vshrl.u32 %v347, 7
        %v349 = vsub.s32 0, %v348
        %v350 = vrot.slane %v345, %v349
        %v351 = vlaneseq
        %v352 = vshrl.u32 %v351, 7
        %v353 = vsub.s32 1, %v352
        %v354 = vrot.slane %v345, %v353
        %v357 = vmul.f32 %v344, %v350
        %v358 = vmul.f32 %v343, %v354
        %v359 = vpack.c.bf16 %v357, %v357
        %v360 = vpack.c.bf16 %v358, %v358
        %v363 = vunpack.c.l.b16 %v359
        %v364 = vunpack.c.l.b16 %v360
        %v365 = vpack.c.b16 %v364, %v363
        %367 = vst [vmem:[#allocation2] sm:$0x33] %v365
        %368 = vrot.lane.b32.xlu0 %v332, 16
        %v369 = vpop.permute.xlu0 %368
        %370 = vrot.lane.b32.xlu0 %v334, 16
        %v371 = vpop.permute.xlu0 %370
        %vm372 = vcmp.lt.s32.totalorder %v341, 16
        %v373 = vsel %vm372, %v369, %v371
        %v374 = vsel %vm372, %v371, %v369
        %s375 = scalar_lea.vmem %s0, 1
        %v376 = vld [vmem:[%s375] ss:$8 sm:$0x3]
        %v378 = vlaneseq
        %v379 = vshrl.u32 %v378, 7
        %v380 = vsub.s32 0, %v379
        %v381 = vrot.slane %v376, %v380
        %v382 = vlaneseq
        %v383 = vshrl.u32 %v382, 7
        %v384 = vsub.s32 1, %v383
        %v385 = vrot.slane %v376, %v384
        %v388 = vmul.f32 %v374, %v381
        %v389 = vmul.f32 %v373, %v385
        %v390 = vpack.c.bf16 %v388, %v388
        %v391 = vpack.c.bf16 %v389, %v389
        %v394 = vunpack.c.l.b16 %v390
        %v395 = vunpack.c.l.b16 %v391
        %v396 = vpack.c.b16 %v395, %v394
        %398 = vst [vmem:[#allocation2 + $0x10] sm:$0x33] %v396
        %399 = vrot.lane.b32.xlu0 %v332, 15
        %v400 = vpop.permute.xlu0 %399
        %401 = vrot.lane.b32.xlu0 %v334, 15
        %v402 = vpop.permute.xlu0 %401
        %vm403 = vcmp.lt.s32.totalorder %v341, 15
        %v404 = vsel %vm403, %v400, %v402
        %v405 = vsel %vm403, %v402, %v400
        %s406 = scalar_lea.vmem %s0, 2
        %v407 = vld [vmem:[%s406] ss:$8 sm:$0x3]
        %v409 = vlaneseq
        %v410 = vshrl.u32 %v409, 7
        %v411 = vsub.s32 0, %v410
        %v412 = vrot.slane %v407, %v411
        %v413 = vlaneseq
        %v414 = vshrl.u32 %v413, 7
        %v415 = vsub.s32 1, %v414
        %v416 = vrot.slane %v407, %v415
        %v419 = vmul.f32 %v405, %v412
        %v420 = vmul.f32 %v404, %v416
        %v421 = vpack.c.bf16 %v419, %v419
        %v422 = vpack.c.bf16 %v420, %v420
        %v425 = vunpack.c.l.b16 %v421
        %v426 = vunpack.c.l.b16 %v422
        %v427 = vpack.c.b16 %v426, %v425
        %429 = vst [vmem:[#allocation2 + $0x20] sm:$0x33] %v427
        %430 = vrot.lane.b32.xlu0 %v332, 1
        %v431 = vpop.permute.xlu0 %430
        %432 = vrot.lane.b32.xlu0 %v334, 1
        %v433 = vpop.permute.xlu0 %432
        %vm434 = vcmp.lt.s32.totalorder %v341, 1
        %v435 = vsel %vm434, %v431, %v433
        %v436 = vsel %vm434, %v433, %v431
        %s437 = scalar_lea.vmem %s0, 3
        %v438 = vld [vmem:[%s437] ss:$8 sm:$0x3]
        %v440 = vlaneseq
        %v441 = vshrl.u32 %v440, 7
        %v442 = vsub.s32 0, %v441
        %v443 = vrot.slane %v438, %v442
        %v444 = vlaneseq
        %v445 = vshrl.u32 %v444, 7
        %v446 = vsub.s32 1, %v445
        %v447 = vrot.slane %v438, %v446
        %v450 = vmul.f32 %v436, %v443
        %v451 = vmul.f32 %v435, %v447
        %v452 = vpack.c.bf16 %v450, %v450
        %v453 = vpack.c.bf16 %v451, %v451
        %v456 = vunpack.c.l.b16 %v452
        %v457 = vunpack.c.l.b16 %v453
        %v458 = vpack.c.b16 %v457, %v456
        %460 = vst [vmem:[#allocation2 + $0x30] sm:$0x33] %v458
        %v461 = vpack.c.bf16 %v332, %v332
        %v462 = vpack.c.bf16 %v334, %v334
        %v465 = vunpack.c.l.b16 %v461
        %v466 = vunpack.c.l.b16 %v462
        %v467 = vpack.c.b16 %v466, %v465
        %469 = vst [vmem:[#allocation2 + $0x40] sm:$0x33] %v467
        %470 = vrot.lane.b32.xlu0 %v332, 127
        %v471 = vpop.permute.xlu0 %470
        %472 = vrot.lane.b32.xlu0 %v334, 127
        %v473 = vpop.permute.xlu0 %472
        %vm474 = vcmp.lt.s32.totalorder %v341, 127
        %v475 = vsel %vm474, %v471, %v473
        %v476 = vsel %vm474, %v473, %v471
        %s477 = scalar_lea.vmem %s0, 5
        %v478 = vld [vmem:[%s477] ss:$8 sm:$0x3]
        %v480 = vlaneseq
        %v481 = vshrl.u32 %v480, 7
        %v482 = vsub.s32 0, %v481
        %v483 = vrot.slane %v478, %v482
        %v484 = vlaneseq
        %v485 = vshrl.u32 %v484, 7
        %v486 = vsub.s32 1, %v485
        %v487 = vrot.slane %v478, %v486
        %v490 = vmul.f32 %v475, %v483
        %v491 = vmul.f32 %v476, %v487
        %v492 = vpack.c.bf16 %v490, %v490
        %v493 = vpack.c.bf16 %v491, %v491
        %v496 = vunpack.c.l.b16 %v492
        %v497 = vunpack.c.l.b16 %v493
        %v498 = vpack.c.b16 %v497, %v496
        %500 = vst [vmem:[#allocation2 + $0x50] sm:$0x33] %v498
        %501 = vrot.lane.b32.xlu0 %v332, 113
        %v502 = vpop.permute.xlu0 %501
        %503 = vrot.lane.b32.xlu0 %v334, 113
        %v504 = vpop.permute.xlu0 %503
        %vm505 = vcmp.lt.s32.totalorder %v341, 113
        %v506 = vsel %vm505, %v502, %v504
        %v507 = vsel %vm505, %v504, %v502
        %s508 = scalar_lea.vmem %s0, 6
        %v509 = vld [vmem:[%s508] ss:$8 sm:$0x3]
        %v511 = vlaneseq
        %v512 = vshrl.u32 %v511, 7
        %v513 = vsub.s32 0, %v512
        %v514 = vrot.slane %v509, %v513
        %v515 = vlaneseq
        %v516 = vshrl.u32 %v515, 7
        %v517 = vsub.s32 1, %v516
        %v518 = vrot.slane %v509, %v517
        %v521 = vmul.f32 %v506, %v514
        %v522 = vmul.f32 %v507, %v518
        %v523 = vpack.c.bf16 %v521, %v521
        %v524 = vpack.c.bf16 %v522, %v522
        %v527 = vunpack.c.l.b16 %v523
        %v528 = vunpack.c.l.b16 %v524
        %v529 = vpack.c.b16 %v528, %v527
        %531 = vst [vmem:[#allocation2 + $0x60] sm:$0x33] %v529
        %532 = vrot.lane.b32.xlu0 %v332, 112
        %v533 = vpop.permute.xlu0 %532
        %534 = vrot.lane.b32.xlu0 %v334, 112
        %v535 = vpop.permute.xlu0 %534
        %vm536 = vcmp.lt.s32.totalorder %v341, 112
        %v537 = vsel %vm536, %v533, %v535
        %v538 = vsel %vm536, %v535, %v533
        %s539 = scalar_lea.vmem %s0, 7
        %v540 = vld [vmem:[%s539] ss:$8 sm:$0x3]
        %v542 = vlaneseq
        %v543 = vshrl.u32 %v542, 7
        %v544 = vsub.s32 0, %v543
        %v545 = vrot.slane %v540, %v544
        %v546 = vlaneseq
        %v547 = vshrl.u32 %v546, 7
        %v548 = vsub.s32 1, %v547
        %v549 = vrot.slane %v540, %v548
        %v552 = vmul.f32 %v537, %v545
        %v553 = vmul.f32 %v538, %v549
        %v554 = vpack.c.bf16 %v552, %v552
        %v555 = vpack.c.bf16 %v553, %v553
        %v558 = vunpack.c.l.b16 %v554
        %v559 = vunpack.c.l.b16 %v555
        %v560 = vpack.c.b16 %v559, %v558
        %562 = vst [vmem:[#allocation2 + $0x70] sm:$0x33] %v560
        %563 = vrot.lane.b32.xlu0 %v332, 111
        %v564 = vpop.permute.xlu0 %563
        %565 = vrot.lane.b32.xlu0 %v334, 111
        %v566 = vpop.permute.xlu0 %565
        %vm567 = vcmp.lt.s32.totalorder %v341, 111
        %v568 = vsel %vm567, %v564, %v566
        %v569 = vsel %vm567, %v566, %v564
        %s570 = scalar_lea.vmem %s0, 16
        %v571 = vld [vmem:[%s570] ss:$8 sm:$0x3]
        %v573 = vlaneseq
        %v574 = vshrl.u32 %v573, 7
        %v575 = vsub.s32 0, %v574
        %v576 = vrot.slane %v571, %v575
        %v577 = vlaneseq
        %v578 = vshrl.u32 %v577, 7
        %v579 = vsub.s32 1, %v578
        %v580 = vrot.slane %v571, %v579
        %v583 = vmul.f32 %v568, %v576
        %v584 = vmul.f32 %v569, %v580
        %v585 = vpack.c.bf16 %v583, %v583
        %v586 = vpack.c.bf16 %v584, %v584
        %v589 = vunpack.c.l.b16 %v585
        %v590 = vunpack.c.l.b16 %v586
        %v591 = vpack.c.b16 %v590, %v589
        %593 = vst [vmem:[#allocation2 + $0x80] sm:$0x33] %v591
        %v594 = vld [vmem:[%s2] sm:$0xff]
        %v595 = vld [vmem:[#allocation2] sm:$0xff]
        %v596 = vld [vmem:[#allocation2 + $0x8] sm:$0xff]
        %v597 = vld [vmem:[#allocation2 + $0x10] sm:$0xff]
        %v598 = vld [vmem:[#allocation2 + $0x18] sm:$0xff]
        %v599 = vld [vmem:[#allocation2 + $0x20] sm:$0xff]
        %v600 = vld [vmem:[#allocation2 + $0x28] sm:$0xff]
        %v601 = vld [vmem:[#allocation2 + $0x30] sm:$0xff]
        %v602 = vld [vmem:[#allocation2 + $0x38] sm:$0xff]
        %v603 = vld [vmem:[#allocation2 + $0x40] sm:$0xff]
        %v604 = vld [vmem:[#allocation2 + $0x48] sm:$0xff]
        %v605 = vld [vmem:[#allocation2 + $0x50] sm:$0xff]
        %v606 = vld [vmem:[#allocation2 + $0x58] sm:$0xff]
        %v607 = vld [vmem:[#allocation2 + $0x60] sm:$0xff]
        %v608 = vld [vmem:[#allocation2 + $0x68] sm:$0xff]
        %v609 = vld [vmem:[#allocation2 + $0x70] sm:$0xff]
        %v610 = vld [vmem:[#allocation2 + $0x78] sm:$0xff]
        %v611 = vld [vmem:[#allocation2 + $0x80] sm:$0xff]
        %v612 = vld [vmem:[#allocation2 + $0x88] sm:$0xff]
        %v613 = vld [vmem:[%s3] sm:$0xff]
        %615 = vset.pattern.permute.xlu0 0
        %616 = vperm.xlu0 %615, %v613
        %v617 = vpop.permute.xlu0 %616
        %v620 = vunpack.c.l.b16 %v594
        %v621 = vunpack.c.h.b16 %v594
        %v622 = vpack.c.b16 %v620, %v620
        %v623 = vpack.c.b16 %v621, %v621
        %v643 = vunpack.c.l.b16 %v595
        %v644 = vunpack.c.h.b16 %v595
        %v645 = vunpack.c.l.b16 %v596
        %v646 = vunpack.c.h.b16 %v596
        %v647 = vunpack.c.l.b16 %v597
        %v648 = vunpack.c.h.b16 %v597
        %v649 = vunpack.c.l.b16 %v598
        %v650 = vunpack.c.h.b16 %v598
        %v651 = vunpack.c.l.b16 %v599
        %v652 = vunpack.c.h.b16 %v599
        %v653 = vunpack.c.l.b16 %v600
        %v654 = vunpack.c.h.b16 %v600
        %v655 = vunpack.c.l.b16 %v601
        %v656 = vunpack.c.h.b16 %v601
        %v657 = vunpack.c.l.b16 %v602
        %v658 = vunpack.c.h.b16 %v602
        %v659 = vunpack.c.l.b16 %v603
        %v660 = vunpack.c.h.b16 %v603
        %v661 = vunpack.c.l.b16 %v604
        %v662 = vunpack.c.h.b16 %v604
        %v663 = vunpack.c.l.b16 %v605
        %v664 = vunpack.c.h.b16 %v605
        %v665 = vunpack.c.l.b16 %v606
        %v666 = vunpack.c.h.b16 %v606
        %v667 = vunpack.c.l.b16 %v607
        %v668 = vunpack.c.h.b16 %v607
        %v669 = vunpack.c.l.b16 %v608
        %v670 = vunpack.c.h.b16 %v608
        %v671 = vunpack.c.l.b16 %v609
        %v672 = vunpack.c.h.b16 %v609
        %v673 = vunpack.c.l.b16 %v610
        %v674 = vunpack.c.h.b16 %v610
        %v675 = vunpack.c.l.b16 %v611
        %v676 = vunpack.c.h.b16 %v611
        %v677 = vunpack.c.l.b16 %v612
        %v678 = vunpack.c.h.b16 %v612
        %v679 = vpack.c.b16 %v645, %v643
        %v680 = vpack.c.b16 %v646, %v644
        %v681 = vpack.c.b16 %v649, %v647
        %v682 = vpack.c.b16 %v650, %v648
        %v683 = vpack.c.b16 %v653, %v651
        %v684 = vpack.c.b16 %v654, %v652
        %v685 = vpack.c.b16 %v657, %v655
        %v686 = vpack.c.b16 %v658, %v656
        %v687 = vpack.c.b16 %v661, %v659
        %v688 = vpack.c.b16 %v662, %v660
        %v689 = vpack.c.b16 %v665, %v663
        %v690 = vpack.c.b16 %v666, %v664
        %v691 = vpack.c.b16 %v669, %v667
        %v692 = vpack.c.b16 %v670, %v668
        %v693 = vpack.c.b16 %v673, %v671
        %v694 = vpack.c.b16 %v674, %v672
        %v695 = vpack.c.b16 %v677, %v675
        %v696 = vpack.c.b16 %v678, %v676
        %vm715 = vcmask 130048
        %v717 = vsel %vm715, %v623, 0
        %719 = vmatprep.subr.bf16.mxu0 %v694
        %720 = vmatpush1.bf16.msra.mxu0 %v693
        %721 = vmatprep.subr.bf16.mxu0 %v692
        %722 = vmatpush1.bf16.msra.mxu0 %v691
        %723 = vmatprep.subr.bf16.mxu0 %v690
        %724 = vmatpush1.bf16.msra.mxu0 %v689
        %725 = vmatprep.subr.bf16.mxu0 %v688
        %726 = vmatpush1.bf16.msra.mxu0 %v687
        %727 = vmatprep.subr.bf16.mxu0 %v686
        %728 = vmatpush1.bf16.msra.mxu0 %v685
        %729 = vmatprep.subr.bf16.mxu0 %v684
        %730 = vmatpush1.bf16.msra.mxu0 %v683
        %731 = vmatprep.subr.bf16.mxu0 %v682
        %732 = vmatpush1.bf16.msra.mxu0 %v681
        %733 = vmatprep.subr.bf16.mxu0 %v680
        %734 = vmatpush1.bf16.msra.mxu0 %v679
        %735 = vmatprep.subr.bf16.mxu0 0
        %736 = vmatpush2.bf16.msra.mxu0 0
        %737 = vmatprep.subr.bf16.mxu0 0
        %738 = vmatpush2.bf16.msra.mxu0 0
        %739 = vmatprep.subr.bf16.mxu0 0
        %740 = vmatpush2.bf16.msra.mxu0 0
        %741 = vmatprep.subr.bf16.mxu0 0
        %742 = vmatpush2.bf16.msra.mxu0 0
        %743 = vmatprep.subr.bf16.mxu0 0
        %744 = vmatpush2.bf16.msra.mxu0 0
        %745 = vmatprep.subr.bf16.mxu0 0
        %746 = vmatpush2.bf16.msra.mxu0 0
        %747 = vmatprep.subr.bf16.mxu0 0
        %748 = vmatpush2.bf16.msra.mxu0 0
        %749 = vmatprep.subr.bf16.mxu0 %v696
        %750 = vmatpush2.bf16.msra.mxu0 %v695
        %751 = vmatprep.mubr.bf16.mxu0 %v717
        %752 = vmatmul.mubr.bf16.gmra.mxu0 %v622
        %v753 = vpop.f32.mrf.mxu0
        %v754 = vadd.f32 %v617, %v753
        %v755 = vpop.f32.mrf.mxu0
        %v756 = vadd.f32 %v617, %v755
        %v757 = vpop.f32.mrf.mxu0
        %v758 = vpop.f32.mrf.mxu0
        %759 = vdwg.mxu0
        %v760 = vmul.f32 %v754, 0.5
        %v761 = vmul.f32 %v756, 0.5
        %762 = vrot.lane.b32.xlu0 %v754, 16
        %v763 = vpop.permute.xlu0 %762
        %764 = vrot.lane.b32.xlu0 %v756, 16
        %v765 = vpop.permute.xlu0 %764
        %v766 = vsel %vm372, %v763, %v765
        %v767 = vsel %vm372, %v765, %v763
        %v768 = vld [vmem:[%s375] ss:$8 sm:$0x3]
        %v770 = vlaneseq
        %v771 = vshrl.u32 %v770, 7
        %v772 = vsub.s32 0, %v771
        %v773 = vrot.slane %v768, %v772
        %v774 = vlaneseq
        %v775 = vshrl.u32 %v774, 7
        %v776 = vsub.s32 1, %v775
        %v777 = vrot.slane %v768, %v776
        %v780 = vmul.f32 %v767, %v773
        %v781 = vmul.f32 %v766, %v777
        %782 = vrot.lane.b32.xlu0 %v754, 112
        %v783 = vpop.permute.xlu0 %782
        %784 = vrot.lane.b32.xlu0 %v756, 112
        %v785 = vpop.permute.xlu0 %784
        %v786 = vsel %vm536, %v783, %v785
        %v787 = vsel %vm536, %v785, %v783
        %v788 = vld [vmem:[%s539] ss:$8 sm:$0x3]
        %v790 = vlaneseq
        %v791 = vshrl.u32 %v790, 7
        %v792 = vsub.s32 0, %v791
        %v793 = vrot.slane %v788, %v792
        %v794 = vlaneseq
        %v795 = vshrl.u32 %v794, 7
        %v796 = vsub.s32 1, %v795
        %v797 = vrot.slane %v788, %v796
        %v800 = vmul.f32 %v786, %v793
        %v801 = vmul.f32 %v787, %v797
        %v802 = vadd.f32 %v780, %v800
        %v803 = vadd.f32 %v781, %v801
        %v804 = vmul.f32 %v802, 0.25
        %v805 = vmul.f32 %v803, 0.25
        %v806 = vadd.f32 %v760, %v804
        %v807 = vadd.f32 %v761, %v805
        %v808 = vmul.f32 %v806, 0.5
        %v809 = vmul.f32 %v807, 0.5
        %810 = vrot.lane.b32.xlu0 %v806, 1
        %v811 = vpop.permute.xlu0 %810
        %812 = vrot.lane.b32.xlu0 %v807, 1
        %v813 = vpop.permute.xlu0 %812
        %v814 = vsel %vm434, %v811, %v813
        %v815 = vsel %vm434, %v813, %v811
        %v816 = vld [vmem:[%s437] ss:$8 sm:$0x3]
        %v818 = vlaneseq
        %v819 = vshrl.u32 %v818, 7
        %v820 = vsub.s32 0, %v819
        %v821 = vrot.slane %v816, %v820
        %v822 = vlaneseq
        %v823 = vshrl.u32 %v822, 7
        %v824 = vsub.s32 1, %v823
        %v825 = vrot.slane %v816, %v824
        %v828 = vmul.f32 %v815, %v821
        %v829 = vmul.f32 %v814, %v825
        %830 = vrot.lane.b32.xlu0 %v806, 127
        %v831 = vpop.permute.xlu0 %830
        %832 = vrot.lane.b32.xlu0 %v807, 127
        %v833 = vpop.permute.xlu0 %832
        %v834 = vsel %vm474, %v831, %v833
        %v835 = vsel %vm474, %v833, %v831
        %v836 = vld [vmem:[%s477] ss:$8 sm:$0x3]
        %v838 = vlaneseq
        %v839 = vshrl.u32 %v838, 7
        %v840 = vsub.s32 0, %v839
        %v841 = vrot.slane %v836, %v840
        %v842 = vlaneseq
        %v843 = vshrl.u32 %v842, 7
        %v844 = vsub.s32 1, %v843
        %v845 = vrot.slane %v836, %v844
        %v848 = vmul.f32 %v834, %v841
        %v849 = vmul.f32 %v835, %v845
        %v850 = vadd.f32 %v828, %v848
        %v851 = vadd.f32 %v829, %v849
        %v852 = vmul.f32 %v850, 0.25
        %v853 = vmul.f32 %v851, 0.25
        %v854 = vadd.f32 %v808, %v852
        %v855 = vadd.f32 %v809, %v853
        %v856 = vmul.f32 %v854, 0.2
        %v857 = vmul.f32 %v855, 0.2
        %v858 = vmax.f32 %v854, %v856
        %v859 = vmax.f32 %v855, %v857
        %v860 = vadd.f32 %v858, %v859
        %861 = vadd.xlane.f32.xlu0 %v860
        %v862 = vpop.xlane.xlu0 %861
        %v863 = vmul.f32 %v862, 0.00390625
        %v864 = vsub.f32 %v858, %v863
        %v865 = vsub.f32 %v859, %v863
        %v866 = vmul.f32 %v864, %v864
        %v867 = vmul.f32 %v865, %v865
        %v868 = vadd.f32 %v866, %v867
        %869 = vadd.xlane.f32.xlu0 %v868
        %v870 = vpop.xlane.xlu0 %869
        %v871 = vmul.f32 %v870, 0.003921569
        %v872 = vrsqrt.pop %v871
        %v873 = vmul.f32 %v331, %v872
        %875 = vset.pattern.permute.xlu0 0
        %876 = vperm.xlu0 %875, %v873
        %v877 = vpop.permute.xlu0 %876
        %v879 = vmul.f32 %v864, %v877
        %v880 = vmul.f32 %v865, %v877
        %882 = vset.pattern.permute.xlu0 1
        %883 = vperm.xlu0 %882, %v331
        %v884 = vpop.permute.xlu0 %883
        %v886 = vadd.f32 %v879, %v884
        %v887 = vadd.f32 %v880, %v884
        %888 = vrot.lane.b32.xlu0 %v886, 17
        %v889 = vpop.permute.xlu0 %888
        %890 = vrot.lane.b32.xlu0 %v887, 17
        %v891 = vpop.permute.xlu0 %890
        %v892 = vsel %vm342, %v889, %v891
        %v893 = vsel %vm342, %v891, %v889
        %v894 = vld [vmem:[%s0] ss:$8 sm:$0x3]
        %v896 = vlaneseq
        %v897 = vshrl.u32 %v896, 7
        %v898 = vsub.s32 0, %v897
        %v899 = vrot.slane %v894, %v898
        %v900 = vlaneseq
        %v901 = vshrl.u32 %v900, 7
        %v902 = vsub.s32 1, %v901
        %v903 = vrot.slane %v894, %v902
        %v906 = vmul.f32 %v893, %v899
        %v907 = vmul.f32 %v892, %v903
        %v908 = vpack.c.bf16 %v906, %v906
        %v909 = vpack.c.bf16 %v907, %v907
        %v912 = vunpack.c.l.b16 %v908
        %v913 = vunpack.c.l.b16 %v909
        %v914 = vpack.c.b16 %v913, %v912
        %916 = vst [vmem:[#allocation2] sm:$0xff] %v914
        %917 = vrot.lane.b32.xlu0 %v886, 16
        %v918 = vpop.permute.xlu0 %917
        %919 = vrot.lane.b32.xlu0 %v887, 16
        %v920 = vpop.permute.xlu0 %919
        %v921 = vsel %vm372, %v918, %v920
        %v922 = vsel %vm372, %v920, %v918
        %v923 = vld [vmem:[%s375] ss:$8 sm:$0x3]
        %v925 = vlaneseq
        %v926 = vshrl.u32 %v925, 7
        %v927 = vsub.s32 0, %v926
        %v928 = vrot.slane %v923, %v927
        %v929 = vlaneseq
        %v930 = vshrl.u32 %v929, 7
        %v931 = vsub.s32 1, %v930
        %v932 = vrot.slane %v923, %v931
        %v935 = vmul.f32 %v922, %v928
        %v936 = vmul.f32 %v921, %v932
        %v937 = vpack.c.bf16 %v935, %v935
        %v938 = vpack.c.bf16 %v936, %v936
        %v941 = vunpack.c.l.b16 %v937
        %v942 = vunpack.c.l.b16 %v938
        %v943 = vpack.c.b16 %v942, %v941
        %945 = vst [vmem:[#allocation2 + $0x10] sm:$0xff] %v943
        %946 = vrot.lane.b32.xlu0 %v886, 15
        %v947 = vpop.permute.xlu0 %946
        %948 = vrot.lane.b32.xlu0 %v887, 15
        %v949 = vpop.permute.xlu0 %948
        %v950 = vsel %vm403, %v947, %v949
        %v951 = vsel %vm403, %v949, %v947
        %v952 = vld [vmem:[%s406] ss:$8 sm:$0x3]
        %v954 = vlaneseq
        %v955 = vshrl.u32 %v954, 7
        %v956 = vsub.s32 0, %v955
        %v957 = vrot.slane %v952, %v956
        %v958 = vlaneseq
        %v959 = vshrl.u32 %v958, 7
        %v960 = vsub.s32 1, %v959
        %v961 = vrot.slane %v952, %v960
        %v964 = vmul.f32 %v951, %v957
        %v965 = vmul.f32 %v950, %v961
        %v966 = vpack.c.bf16 %v964, %v964
        %v967 = vpack.c.bf16 %v965, %v965
        %v970 = vunpack.c.l.b16 %v966
        %v971 = vunpack.c.l.b16 %v967
        %v972 = vpack.c.b16 %v971, %v970
        %974 = vst [vmem:[#allocation2 + $0x20] sm:$0xff] %v972
        %975 = vrot.lane.b32.xlu0 %v886, 1
        %v976 = vpop.permute.xlu0 %975
        %977 = vrot.lane.b32.xlu0 %v887, 1
        %v978 = vpop.permute.xlu0 %977
        %v979 = vsel %vm434, %v976, %v978
        %v980 = vsel %vm434, %v978, %v976
        %v981 = vld [vmem:[%s437] ss:$8 sm:$0x3]
        %v983 = vlaneseq
        %v984 = vshrl.u32 %v983, 7
        %v985 = vsub.s32 0, %v984
        %v986 = vrot.slane %v981, %v985
        %v987 = vlaneseq
        %v988 = vshrl.u32 %v987, 7
        %v989 = vsub.s32 1, %v988
        %v990 = vrot.slane %v981, %v989
        %v993 = vmul.f32 %v980, %v986
        %v994 = vmul.f32 %v979, %v990
        %v995 = vpack.c.bf16 %v993, %v993
        %v996 = vpack.c.bf16 %v994, %v994
        %v999 = vunpack.c.l.b16 %v995
        %v1000 = vunpack.c.l.b16 %v996
        %v1001 = vpack.c.b16 %v1000, %v999
        %1003 = vst [vmem:[#allocation2 + $0x30] sm:$0xff] %v1001
        %v1004 = vpack.c.bf16 %v886, %v886
        %v1005 = vpack.c.bf16 %v887, %v887
        %v1008 = vunpack.c.l.b16 %v1004
        %v1009 = vunpack.c.l.b16 %v1005
        %v1010 = vpack.c.b16 %v1009, %v1008
        %1012 = vst [vmem:[#allocation2 + $0x40] sm:$0xff] %v1010
        %1013 = vrot.lane.b32.xlu0 %v886, 127
        %v1014 = vpop.permute.xlu0 %1013
        %1015 = vrot.lane.b32.xlu0 %v887, 127
        %v1016 = vpop.permute.xlu0 %1015
        %v1017 = vsel %vm474, %v1014, %v1016
        %v1018 = vsel %vm474, %v1016, %v1014
        %v1019 = vld [vmem:[%s477] ss:$8 sm:$0x3]
        %v1021 = vlaneseq
        %v1022 = vshrl.u32 %v1021, 7
        %v1023 = vsub.s32 0, %v1022
        %v1024 = vrot.slane %v1019, %v1023
        %v1025 = vlaneseq
        %v1026 = vshrl.u32 %v1025, 7
        %v1027 = vsub.s32 1, %v1026
        %v1028 = vrot.slane %v1019, %v1027
        %v1031 = vmul.f32 %v1017, %v1024
        %v1032 = vmul.f32 %v1018, %v1028
        %v1033 = vpack.c.bf16 %v1031, %v1031
        %v1034 = vpack.c.bf16 %v1032, %v1032
        %v1037 = vunpack.c.l.b16 %v1033
        %v1038 = vunpack.c.l.b16 %v1034
        %v1039 = vpack.c.b16 %v1038, %v1037
        %1041 = vst [vmem:[#allocation2 + $0x50] sm:$0xff] %v1039
        %1042 = vrot.lane.b32.xlu0 %v886, 113
        %v1043 = vpop.permute.xlu0 %1042
        %1044 = vrot.lane.b32.xlu0 %v887, 113
        %v1045 = vpop.permute.xlu0 %1044
        %v1046 = vsel %vm505, %v1043, %v1045
        %v1047 = vsel %vm505, %v1045, %v1043
        %v1048 = vld [vmem:[%s508] ss:$8 sm:$0x3]
        %v1050 = vlaneseq
        %v1051 = vshrl.u32 %v1050, 7
        %v1052 = vsub.s32 0, %v1051
        %v1053 = vrot.slane %v1048, %v1052
        %v1054 = vlaneseq
        %v1055 = vshrl.u32 %v1054, 7
        %v1056 = vsub.s32 1, %v1055
        %v1057 = vrot.slane %v1048, %v1056
        %v1060 = vmul.f32 %v1046, %v1053
        %v1061 = vmul.f32 %v1047, %v1057
        %v1062 = vpack.c.bf16 %v1060, %v1060
        %v1063 = vpack.c.bf16 %v1061, %v1061
        %v1066 = vunpack.c.l.b16 %v1062
        %v1067 = vunpack.c.l.b16 %v1063
        %v1068 = vpack.c.b16 %v1067, %v1066
        %1070 = vst [vmem:[#allocation2 + $0x60] sm:$0xff] %v1068
        %1071 = vrot.lane.b32.xlu0 %v886, 112
        %v1072 = vpop.permute.xlu0 %1071
        %1073 = vrot.lane.b32.xlu0 %v887, 112
        %v1074 = vpop.permute.xlu0 %1073
        %v1075 = vsel %vm536, %v1072, %v1074
        %v1076 = vsel %vm536, %v1074, %v1072
        %v1077 = vld [vmem:[%s539] ss:$8 sm:$0x3]
        %v1079 = vlaneseq
        %v1080 = vshrl.u32 %v1079, 7
        %v1081 = vsub.s32 0, %v1080
        %v1082 = vrot.slane %v1077, %v1081
        %v1083 = vlaneseq
        %v1084 = vshrl.u32 %v1083, 7
        %v1085 = vsub.s32 1, %v1084
        %v1086 = vrot.slane %v1077, %v1085
        %v1089 = vmul.f32 %v1075, %v1082
        %v1090 = vmul.f32 %v1076, %v1086
        %v1091 = vpack.c.bf16 %v1089, %v1089
        %v1092 = vpack.c.bf16 %v1090, %v1090
        %v1095 = vunpack.c.l.b16 %v1091
        %v1096 = vunpack.c.l.b16 %v1092
        %v1097 = vpack.c.b16 %v1096, %v1095
        %1099 = vst [vmem:[#allocation2 + $0x70] sm:$0xff] %v1097
        %1100 = vrot.lane.b32.xlu0 %v886, 111
        %v1101 = vpop.permute.xlu0 %1100
        %1102 = vrot.lane.b32.xlu0 %v887, 111
        %v1103 = vpop.permute.xlu0 %1102
        %v1104 = vsel %vm567, %v1101, %v1103
        %v1105 = vsel %vm567, %v1103, %v1101
        %v1106 = vld [vmem:[%s570] ss:$8 sm:$0x3]
        %v1108 = vlaneseq
        %v1109 = vshrl.u32 %v1108, 7
        %v1110 = vsub.s32 0, %v1109
        %v1111 = vrot.slane %v1106, %v1110
        %v1112 = vlaneseq
        %v1113 = vshrl.u32 %v1112, 7
        %v1114 = vsub.s32 1, %v1113
        %v1115 = vrot.slane %v1106, %v1114
        %v1118 = vmul.f32 %v1104, %v1111
        %v1119 = vmul.f32 %v1105, %v1115
        %v1120 = vpack.c.bf16 %v1118, %v1118
        %v1121 = vpack.c.bf16 %v1119, %v1119
        %v1124 = vunpack.c.l.b16 %v1120
        %v1125 = vunpack.c.l.b16 %v1121
        %v1126 = vpack.c.b16 %v1125, %v1124
        %1128 = vst [vmem:[#allocation2 + $0x80] sm:$0xff] %v1126
        %v1129 = vld [vmem:[%s4] sm:$0xff]
        %v1130 = vld [vmem:[#allocation2] sm:$0xff]
        %v1131 = vld [vmem:[#allocation2 + $0x8] sm:$0xff]
        %v1132 = vld [vmem:[#allocation2 + $0x10] sm:$0xff]
        %v1133 = vld [vmem:[#allocation2 + $0x18] sm:$0xff]
        %v1134 = vld [vmem:[#allocation2 + $0x20] sm:$0xff]
        %v1135 = vld [vmem:[#allocation2 + $0x28] sm:$0xff]
        %v1136 = vld [vmem:[#allocation2 + $0x30] sm:$0xff]
        %v1137 = vld [vmem:[#allocation2 + $0x38] sm:$0xff]
        %v1138 = vld [vmem:[#allocation2 + $0x40] sm:$0xff]
        %v1139 = vld [vmem:[#allocation2 + $0x48] sm:$0xff]
        %v1140 = vld [vmem:[#allocation2 + $0x50] sm:$0xff]
        %v1141 = vld [vmem:[#allocation2 + $0x58] sm:$0xff]
        %v1142 = vld [vmem:[#allocation2 + $0x60] sm:$0xff]
        %v1143 = vld [vmem:[#allocation2 + $0x68] sm:$0xff]
        %v1144 = vld [vmem:[#allocation2 + $0x70] sm:$0xff]
        %v1145 = vld [vmem:[#allocation2 + $0x78] sm:$0xff]
        %v1146 = vld [vmem:[#allocation2 + $0x80] sm:$0xff]
        %v1147 = vld [vmem:[#allocation2 + $0x88] sm:$0xff]
        %v1148 = vld [vmem:[%s5] sm:$0xff]
        %1150 = vset.pattern.permute.xlu0 0
        %1151 = vperm.xlu0 %1150, %v1148
        %v1152 = vpop.permute.xlu0 %1151
        %v1155 = vunpack.c.l.b16 %v1129
        %v1156 = vunpack.c.h.b16 %v1129
        %v1157 = vpack.c.b16 %v1155, %v1155
        %v1158 = vpack.c.b16 %v1156, %v1156
        %v1178 = vunpack.c.l.b16 %v1130
        %v1179 = vunpack.c.h.b16 %v1130
        %v1180 = vunpack.c.l.b16 %v1131
        %v1181 = vunpack.c.h.b16 %v1131
        %v1182 = vunpack.c.l.b16 %v1132
        %v1183 = vunpack.c.h.b16 %v1132
        %v1184 = vunpack.c.l.b16 %v1133
        %v1185 = vunpack.c.h.b16 %v1133
        %v1186 = vunpack.c.l.b16 %v1134
        %v1187 = vunpack.c.h.b16 %v1134
        %v1188 = vunpack.c.l.b16 %v1135
        %v1189 = vunpack.c.h.b16 %v1135
        %v1190 = vunpack.c.l.b16 %v1136
        %v1191 = vunpack.c.h.b16 %v1136
        %v1192 = vunpack.c.l.b16 %v1137
        %v1193 = vunpack.c.h.b16 %v1137
        %v1194 = vunpack.c.l.b16 %v1138
        %v1195 = vunpack.c.h.b16 %v1138
        %v1196 = vunpack.c.l.b16 %v1139
        %v1197 = vunpack.c.h.b16 %v1139
        %v1198 = vunpack.c.l.b16 %v1140
        %v1199 = vunpack.c.h.b16 %v1140
        %v1200 = vunpack.c.l.b16 %v1141
        %v1201 = vunpack.c.h.b16 %v1141
        %v1202 = vunpack.c.l.b16 %v1142
        %v1203 = vunpack.c.h.b16 %v1142
        %v1204 = vunpack.c.l.b16 %v1143
        %v1205 = vunpack.c.h.b16 %v1143
        %v1206 = vunpack.c.l.b16 %v1144
        %v1207 = vunpack.c.h.b16 %v1144
        %v1208 = vunpack.c.l.b16 %v1145
        %v1209 = vunpack.c.h.b16 %v1145
        %v1210 = vunpack.c.l.b16 %v1146
        %v1211 = vunpack.c.h.b16 %v1146
        %v1212 = vunpack.c.l.b16 %v1147
        %v1213 = vunpack.c.h.b16 %v1147
        %v1214 = vpack.c.b16 %v1180, %v1178
        %v1215 = vpack.c.b16 %v1181, %v1179
        %v1216 = vpack.c.b16 %v1184, %v1182
        %v1217 = vpack.c.b16 %v1185, %v1183
        %v1218 = vpack.c.b16 %v1188, %v1186
        %v1219 = vpack.c.b16 %v1189, %v1187
        %v1220 = vpack.c.b16 %v1192, %v1190
        %v1221 = vpack.c.b16 %v1193, %v1191
        %v1222 = vpack.c.b16 %v1196, %v1194
        %v1223 = vpack.c.b16 %v1197, %v1195
        %v1224 = vpack.c.b16 %v1200, %v1198
        %v1225 = vpack.c.b16 %v1201, %v1199
        %v1226 = vpack.c.b16 %v1204, %v1202
        %v1227 = vpack.c.b16 %v1205, %v1203
        %v1228 = vpack.c.b16 %v1208, %v1206
        %v1229 = vpack.c.b16 %v1209, %v1207
        %v1230 = vpack.c.b16 %v1212, %v1210
        %v1231 = vpack.c.b16 %v1213, %v1211
        %v1251 = vsel %vm715, %v1158, 0
        %1253 = vmatprep.subr.bf16.mxu0 %v1229
        %1254 = vmatpush1.bf16.msra.mxu0 %v1228
        %1255 = vmatprep.subr.bf16.mxu0 %v1227
        %1256 = vmatpush1.bf16.msra.mxu0 %v1226
        %1257 = vmatprep.subr.bf16.mxu0 %v1225
        %1258 = vmatpush1.bf16.msra.mxu0 %v1224
        %1259 = vmatprep.subr.bf16.mxu0 %v1223
        %1260 = vmatpush1.bf16.msra.mxu0 %v1222
        %1261 = vmatprep.subr.bf16.mxu0 %v1221
        %1262 = vmatpush1.bf16.msra.mxu0 %v1220
        %1263 = vmatprep.subr.bf16.mxu0 %v1219
        %1264 = vmatpush1.bf16.msra.mxu0 %v1218
        %1265 = vmatprep.subr.bf16.mxu0 %v1217
        %1266 = vmatpush1.bf16.msra.mxu0 %v1216
        %1267 = vmatprep.subr.bf16.mxu0 %v1215
        %1268 = vmatpush1.bf16.msra.mxu0 %v1214
        %1269 = vmatprep.subr.bf16.mxu0 0
        %1270 = vmatpush2.bf16.msra.mxu0 0
        %1271 = vmatprep.subr.bf16.mxu0 0
        %1272 = vmatpush2.bf16.msra.mxu0 0
        %1273 = vmatprep.subr.bf16.mxu0 0
        %1274 = vmatpush2.bf16.msra.mxu0 0
        %1275 = vmatprep.subr.bf16.mxu0 0
        %1276 = vmatpush2.bf16.msra.mxu0 0
        %1277 = vmatprep.subr.bf16.mxu0 0
        %1278 = vmatpush2.bf16.msra.mxu0 0
        %1279 = vmatprep.subr.bf16.mxu0 0
        %1280 = vmatpush2.bf16.msra.mxu0 0
        %1281 = vmatprep.subr.bf16.mxu0 0
        %1282 = vmatpush2.bf16.msra.mxu0 0
        %1283 = vmatprep.subr.bf16.mxu0 %v1231
        %1284 = vmatpush2.bf16.msra.mxu0 %v1230
        %1285 = vmatprep.mubr.bf16.mxu0 %v1251
        %1286 = vmatmul.mubr.bf16.gmra.mxu0 %v1157
        %v1287 = vpop.f32.mrf.mxu0
        %v1288 = vadd.f32 %v1152, %v1287
        %v1289 = vpop.f32.mrf.mxu0
        %v1290 = vadd.f32 %v1152, %v1289
        %v1291 = vpop.f32.mrf.mxu0
        %v1292 = vpop.f32.mrf.mxu0
        %1293 = vdwg.mxu0
        %v1294 = vmul.f32 %v1288, 0.2
        %v1295 = vmul.f32 %v1290, 0.2
        %v1296 = vmax.f32 %v1288, %v1294
        %v1297 = vmax.f32 %v1290, %v1295
        %v1298 = vadd.f32 %v1296, %v1297
        %1299 = vadd.xlane.f32.xlu0 %v1298
        %v1300 = vpop.xlane.xlu0 %1299
        %v1301 = vmul.f32 %v1300, 0.00390625
        %v1302 = vsub.f32 %v1296, %v1301
        %v1303 = vsub.f32 %v1297, %v1301
        %v1304 = vmul.f32 %v1302, %v1302
        %v1305 = vmul.f32 %v1303, %v1303
        %v1306 = vadd.f32 %v1304, %v1305
        %1307 = vadd.xlane.f32.xlu0 %v1306
        %v1308 = vpop.xlane.xlu0 %1307
        %v1309 = vmul.f32 %v1308, 0.003921569
        %v1310 = vrsqrt.pop %v1309
        %v1311 = vmul.f32 %v331, %v1310
        %1313 = vset.pattern.permute.xlu0 2
        %1314 = vperm.xlu0 %1313, %v1311
        %v1315 = vpop.permute.xlu0 %1314
        %v1317 = vmul.f32 %v1302, %v1315
        %v1318 = vmul.f32 %v1303, %v1315
        %1319 = vset.pattern.permute.xlu0 3
        %1320 = vperm.xlu0 %1319, %v331
        %v1321 = vpop.permute.xlu0 %1320
        %v1323 = vadd.f32 %v1317, %v1321
        %v1324 = vadd.f32 %v1318, %v1321
        %1325 = vst [vmem:[%s307] sm:$0xff] %v1323
        %1326 = vst [vmem:[%s307 + $0x8] sm:$0xff] %v1324
        %s1327 = sand.u32 %s189, 1
        %s1328 = scalar_lea.sflag [#allocation5], %s1327
        %s1329 = sand.u32 %s189, 1
        %s1330 = smul.addr %s1329, 16
        %s1331 = scalar_lea.vmem [#allocation6], %s1330
        // Predicated region
        $region53: #{tpu_custom_call.1} parent=47 // pred_check
          %p1332 = pneg %p199
        $region54: #{tpu_custom_call.1} parent=47 // pred_check_branch
          %1334 = sbr.rel (%p1332) target = $region56
        $region55: #{tpu_custom_call.1} parent=47 // pred_region
          %s1336 = ssub.s32 256, 256
          %1337 = vsyncadd %s1328, %s1336
          %s1338 = smul.addr %s24, 2
          %s1339 = smul.addr %s1338, 128
          %s1340 = scalar_lea.hbm %s7, %s1339
          %s1342 = sshll.u32 %s1331, 4
          %s1343 = int_to_ptr.vmem [resolvable:$true] %s1342
          %1345 = dma.vmem_to_hbm [thread:$0]  %s1343, 256, %s1340, %s1328
        $region56: #{tpu_custom_call.1} parent=47 // pred_fallthru
          _
      $region48: #{tpu_custom_call.1} parent=5 // pred_fallthru
        _
      %p1346 = scmp.le.s32.totalorder 2, %s19
      // Predicated region
      $region57: #{tpu_custom_call.1} parent=5 // pred_check
        %p1347 = pneg %p1346
      $region58: #{tpu_custom_call.1} parent=5 // pred_check_branch
        %1349 = sbr.rel (%p1347) target = $region60
      $region59: #{tpu_custom_call.1} parent=5 // pred_region
        %s1350 = ssub.s32 %s19, 2
        // Predicated region
        $region61: #{tpu_custom_call.1} parent=59 // pred_check
          %p1351 = pneg %p205
        $region62: #{tpu_custom_call.1} parent=59 // pred_check_branch
          %1353 = sbr.rel (%p1351) target = $region64
        $region63: #{tpu_custom_call.1} parent=59 // pred_region
          %s1354 = sand.u32 %s190, 1
          %s1355 = scalar_lea.sflag [#allocation5], %s1354
          %s1356 = sand.u32 %s190, 1
          %s1357 = smul.addr %s1356, 16
          %s1358 = scalar_lea.vmem [#allocation6], %s1357
          %1359 = dma.done %s1355, 256
        $region64: #{tpu_custom_call.1} parent=59 // pred_fallthru
          _
      $region60: #{tpu_custom_call.1} parent=5 // pred_fallthru
        _
    $region6: #{tpu_custom_call.1} parent=1 // loop_footer
      %s23 = sadd.s32 1, %s19
    $region7: #{tpu_custom_call.1} parent=1 // loop_footer_branch
      %18 = sbr.rel target = $region3
    $region8: #{tpu_custom_call.1} parent=1 // loop_exit
      _
    %1360 = vsyncpa [#allocation4], 1
    %s1361 = scalar_lea.sflag [#allocation4], 1
    %1362 = vsyncpa %s1361, 1
    %1363 = vsyncpa [#allocation5], 1
    %s1364 = scalar_lea.sflag [#allocation5], 1
    %1365 = vsyncpa %s1364, 1

</llo_original>
